<compile_context>
chip_gen: v7x
topology: tpu7x:2x2x1
jax: 0.10.0
libtpu: 0.0.40
codegen_flags: <defaults>
</compile_context>

<pallas_src>
import functools

import jax
import jax.numpy as jnp
import numpy as np
from jax import lax
from jax.experimental import pallas as pl
from jax.experimental.pallas import tpu as pltpu


# ----------------------------- Fused CBAM kernel -----------------------------
def _cbam_kernel(x_ref, w1_ref, w2_ref, wall_ref, o_ref,
                 mpad_ref, gsp_ref, *, Bt, H, W, K, PAD, LPAD):
    C = x_ref.shape[1]
    HW = H * W
    f32 = jnp.float32

    w1 = w1_ref[...]                       # (Cmid, C)   Conv2d(ch, ch//r, 1)
    w2 = w2_ref[...]                       # (C, Cmid)   Conv2d(ch//r, ch, 1)

    # ---- zero only the halo lanes of the padded scratch --------------------
    # The interior is fully overwritten for every image below.  This is done
    # every grid step (not under pl.when(program_id==0)) because with the
    # batch axis marked "parallel" each TensorCore owns its own scratch and a
    # different slice of the grid, so a step-0-only init would be unsafe.
    mpad_ref[:, pl.ds(0, LPAD)] = jnp.zeros((2 * Bt, LPAD), f32)
    mpad_ref[:, pl.ds(LPAD + HW, LPAD)] = jnp.zeros((2 * Bt, LPAD), f32)

    # ---- Pass 1: per-image global avg/max pooling over HW -> (C, 2*Bt) -----
    lane2bt = jax.lax.broadcasted_iota(jnp.int32, (C, 2 * Bt), 1)

    def pool_body(b, pools):
        xb = x_ref[b].astype(f32)                           # (C, HW)
        avg = jnp.mean(xb, axis=1, keepdims=True)           # (C, 1)
        mx = jnp.max(xb, axis=1, keepdims=True)             # (C, 1)
        pools = jnp.where(lane2bt == b, avg, pools)          # column b      <- avg
        pools = jnp.where(lane2bt == (Bt + b), mx, pools)    # column Bt + b <- max
        return pools

    pools = lax.fori_loop(0, Bt, pool_body, jnp.zeros((C, 2 * Bt), f32))

    # ---- Pass 2: ONE batched channel-MLP for the whole tile ----------------
    hmid = jnp.maximum(jnp.dot(w1, pools, preferred_element_type=f32), 0.0)   # (Cmid, 2*Bt)
    hsum = hmid[:, :Bt] + hmid[:, Bt:]          # (Cmid, Bt): mlp(avg)+mlp(max) by linearity of w2
    gate_ch = jax.nn.sigmoid(jnp.dot(w2, hsum, preferred_element_type=f32))   # (C, Bt)

    lane_bt = jax.lax.broadcasted_iota(jnp.int32, (C, Bt), 1)

    def ch_gate(b):
        # column b of gate_ch as (C, 1) without dynamic-lane slicing
        return jnp.sum(jnp.where(lane_bt == b, gate_ch, 0.0), axis=1, keepdims=True)

    # ---- Pass 3: channel-pooled maps of the gated tensor, sublane-stacked --
    # rows [0, Bt)      : mean over channels of x1   (avg maps)
    # rows [Bt, 2*Bt)   : max  over channels of x1   (max maps)
    def maps_body(b, carry):
        x1 = x_ref[b].astype(f32) * ch_gate(b)                           # (C, HW)
        mpad_ref[pl.ds(b, 1), pl.ds(LPAD, HW)] = jnp.mean(x1, axis=0, keepdims=True)
        mpad_ref[pl.ds(Bt + b, 1), pl.ds(LPAD, HW)] = jnp.max(x1, axis=0, keepdims=True)
        return carry

    lax.fori_loop(0, Bt, maps_body, 0)

    # ---- Pass 4: 7x7 "same" conv, all 2*Bt stacked maps at once ------------
    # Tap (c, dy, dx) is a static lane-offset slice of the padded scratch.
    # Vertical borders come from the zero halo; horizontal borders are masked
    # once per dx (the mask distributes over the per-dx sum).
    col = jax.lax.broadcasted_iota(jnp.int32, (1, HW), 1) % W
    sa = jnp.zeros((2 * Bt, HW), f32)
    for dx in range(K):
        acc = jnp.zeros((2 * Bt, HW), f32)
        for dy in range(K):
            off = LPAD + (dy - PAD) * W + (dx - PAD)                      # static
            t = dy * K + dx
            wcol = wall_ref[:, pl.ds(t, 1)]                               # (2*Bt, 1)
            acc = acc + wcol * mpad_ref[:, pl.ds(off, HW)]                # (2*Bt, HW)
        if dx == PAD:
            sa = sa + acc                                                 # mask all-true
        else:
            ok = (col >= (PAD - dx)) & (col < (W + PAD - dx))
            sa = sa + jnp.where(ok, acc, 0.0)
    # per-image spatial gate: sum the avg-row and max-row contributions
    gsp_ref[...] = jax.nn.sigmoid(sa[:Bt] + sa[Bt:])                      # (Bt, HW)

    # ---- Pass 5: final gating + lane-dense store ----------------------------
    def out_body(b, carry):
        xb = x_ref[b].astype(f32)                                         # (C, HW)
        gsp_row = gsp_ref[pl.ds(b, 1), :]                                 # (1, HW)
        o_ref[b] = (xb * ch_gate(b) * gsp_row).astype(o_ref.dtype)
        return carry

    lax.fori_loop(0, Bt, out_body, 0)


# ----------------------------- Wrapper -----------------------------
def _pick_batch_tile(B, C, HW, itemsize=4, target_bytes=4 << 20, max_bt=32,
                     min_steps=2):
    """Largest batch tile whose input block is ~target_bytes, with >=min_steps
    grid steps (so megacore / both v7x TensorCores get work)."""
    per_image = max(C * HW * itemsize, 1)
    bt = int(max(1, min(B, max_bt, target_bytes // per_image)))
    while bt > 1 and -(-B // bt) < min_steps:
        bt = max(1, bt // 2)
    return bt


def cbam_pallas(x, w1, w2, ws_flat, k=7):
    B, C, H, W = x.shape
    HW = H * W
    Cmid = w1.shape[0]
    PAD = k // 2
    PADTOT = PAD * W + PAD                     # max |flat-index shift| of a KxK tap
    LPAD = ((max(PADTOT, 1) + 127) // 128) * 128   # 128-aligned halo >= PADTOT
    Wscr = LPAD + HW + LPAD

    Bt = _pick_batch_tile(B, C, HW, itemsize=x.dtype.itemsize)
    n_steps = -(-B // Bt)
    Bp = n_steps * Bt

    xf = x.reshape(B, C, HW)                   # glue reshape (contiguous, free)
    if Bp != B:                                # ragged batch: pad instead of Bt=1
        xf = jnp.pad(xf, ((0, Bp - B), (0, 0), (0, 0)))

    # spatial-conv weights replicated per tile row: rows [0,Bt) avg-channel
    # weights, rows [Bt,2Bt) max-channel weights.
    w_all = jnp.repeat(ws_flat.reshape(2, k * k), Bt, axis=0)   # (2*Bt, k*k)

    out_f = pl.pallas_call(
        functools.partial(_cbam_kernel, Bt=Bt, H=H, W=W, K=k, PAD=PAD, LPAD=LPAD),
        out_shape=jax.ShapeDtypeStruct((Bp, C, HW), x.dtype),
        grid=(n_steps,),
        in_specs=[
            pl.BlockSpec((Bt, C, HW), lambda i: (i, 0, 0)),
            pl.BlockSpec((Cmid, C), lambda i: (0, 0)),
            pl.BlockSpec((C, Cmid), lambda i: (0, 0)),
            pl.BlockSpec((2 * Bt, k * k), lambda i: (0, 0)),
        ],
        out_specs=pl.BlockSpec((Bt, C, HW), lambda i: (i, 0, 0)),
        scratch_shapes=[
            pltpu.VMEM((2 * Bt, Wscr), jnp.float32),   # zero-halo pooled maps
            pltpu.VMEM((Bt, HW), jnp.float32),         # spatial gate per image
        ],
        compiler_params=pltpu.CompilerParams(
            dimension_semantics=("parallel",),
            # 48 MiB: plenty under v5e/v6e's 128 MiB, leaves headroom on v7x's 64 MiB
            vmem_limit_bytes=48 * 1024 * 1024,
        ),
    )(xf, w1, w2, w_all)

    if Bp != B:
        out_f = out_f[:B]
    return out_f.reshape(B, C, H, W)           # glue reshape (free)


# ----------------------------- Pure-JAX reference -----------------------------
def cbam_ref(x, w1, w2, ws_flat, k=7):
    pad = k // 2
    avg_pool = jnp.mean(x, axis=(2, 3), keepdims=True)
    max_pool = jnp.max(x, axis=(2, 3), keepdims=True)

    def mlp(p):
        h = jnp.einsum('mc,bcij->bmij', w1, p)
        h = jnp.maximum(h, 0.0)
        return jnp.einsum('cm,bmij->bcij', w2, h)

    att = mlp(avg_pool) + mlp(max_pool)
    x = x * jax.nn.sigmoid(att)
    avg = jnp.mean(x, axis=1, keepdims=True)
    mx = jnp.max(x, axis=1, keepdims=True)
    inp = jnp.concatenate([avg, mx], axis=1)
    wconv = ws_flat.reshape(1, 2, k, k)
    sp = jax.lax.conv_general_dilated(
        inp, wconv, window_strides=(1, 1),
        padding=((pad, pad), (pad, pad)),
        dimension_numbers=('NCHW', 'OIHW', 'NCHW'))
    return x * jax.nn.sigmoid(sp)


if __name__ == "__main__":
    # small shapes consistent with CBAM(ch=16, k=7, r=8); B=4 exercises Bt=2
    # (sublane-stacked conv rows + 2 grid steps).
    B, C, H, W = 4, 16, 16, 16
    r, K = 8, 7
    Cmid = C // r

    key = jax.random.PRNGKey(0)
    kx, k1, k2, k3 = jax.random.split(key, 4)
    x = jax.random.normal(kx, (B, C, H, W), jnp.float32)
    # deterministic synthetic weights (shapes from nn.Conv2d definitions, bias=False)
    w1 = jax.random.normal(k1, (Cmid, C), jnp.float32) * (1.0 / np.sqrt(C))            # Conv2d(C, C//r, 1)
    w2 = jax.random.normal(k2, (C, Cmid), jnp.float32) * (1.0 / np.sqrt(Cmid))         # Conv2d(C//r, C, 1)
    ws = jax.random.normal(k3, (2 * K * K,), jnp.float32) * (1.0 / np.sqrt(2 * K * K))  # Conv2d(2, 1, 7)

    out = jax.block_until_ready(cbam_pallas(x, w1, w2, ws, k=K))
    ref = jax.block_until_ready(cbam_ref(x, w1, w2, ws, k=K))
    np.testing.assert_allclose(np.asarray(out), np.asarray(ref), rtol=1e-4, atol=1e-4)
    print("KERNEL_OK")
</pallas_src>

<mosaic_0001>
module attributes {stable_mosaic.version = 11 : i64} {
  func.func @_cbam_kernel(%arg0: i32, %arg1: memref<2x16x256xf32, #tpu.memory_space<vmem>>, %arg2: memref<2x16xf32, #tpu.memory_space<vmem>>, %arg3: memref<16x2xf32, #tpu.memory_space<vmem>>, %arg4: memref<4x49xf32, #tpu.memory_space<vmem>>, %arg5: memref<2x16x256xf32, #tpu.memory_space<vmem>>, %arg6: memref<4x512xf32, #tpu.memory_space<vmem>>, %arg7: memref<2x256xf32, #tpu.memory_space<vmem>>) attributes {dimension_semantics = [#tpu.dimension_semantics<parallel>], iteration_bounds = array<i64: 2>, scalar_prefetch = 0 : i64, scratch_operands = 2 : i64, tpu.core_type = #tpu.core_type<tc>, window_params = [{transform_indices = @transform_0, window_bounds = array<i64: 2, 16, 256>}, {pipeline_mode = #tpu.pipeline_mode<synchronous>, transform_indices = @transform_1, window_bounds = array<i64: 2, 16>}, {pipeline_mode = #tpu.pipeline_mode<synchronous>, transform_indices = @transform_2, window_bounds = array<i64: 16, 2>}, {pipeline_mode = #tpu.pipeline_mode<synchronous>, transform_indices = @transform_3, window_bounds = array<i64: 4, 49>}, {transform_indices = @transform_4, window_bounds = array<i64: 2, 16, 256>}]} {
    %c0 = arith.constant 0 : index
    %c0_0 = arith.constant 0 : index
    %0 = vector.load %arg2[%c0, %c0_0] : memref<2x16xf32, #tpu.memory_space<vmem>>, vector<2x16xf32>
    %c0_1 = arith.constant 0 : index
    %c0_2 = arith.constant 0 : index
    %1 = vector.load %arg3[%c0_1, %c0_2] : memref<16x2xf32, #tpu.memory_space<vmem>>, vector<16x2xf32>
    %cst = arith.constant 0.000000e+00 : f32
    %2 = vector.broadcast %cst : f32 to vector<4x128xf32>
    %c0_3 = arith.constant 0 : index
    %c0_4 = arith.constant 0 : index
    %3 = vector.load %arg6[%c0_3, %c0_4] : memref<4x512xf32, #tpu.memory_space<vmem>>, vector<4x128xf32>
    tpu.vector_store %arg6[%c0_3, %c0_4], %2 {strides = array<i32>} : memref<4x512xf32, #tpu.memory_space<vmem>>, vector<4x128xf32>,
    %cst_5 = arith.constant 0.000000e+00 : f32
    %4 = vector.broadcast %cst_5 : f32 to vector<4x128xf32>
    %c0_6 = arith.constant 0 : index
    %c384 = arith.constant 384 : index
    %5 = vector.load %arg6[%c0_6, %c384] : memref<4x512xf32, #tpu.memory_space<vmem>>, vector<4x128xf32>
    tpu.vector_store %arg6[%c0_6, %c384], %4 {strides = array<i32>} : memref<4x512xf32, #tpu.memory_space<vmem>>, vector<4x128xf32>,
    %6 = tpu.iota {dimensions = array<i32: 1>} : vector<16x4xi32>
    %cst_7 = arith.constant 0.000000e+00 : f32
    %7 = vector.broadcast %cst_7 : f32 to vector<16x4xf32>
    %c0_i32 = arith.constant 0 : i32
    %c2_i32 = arith.constant 2 : i32
    %8 = arith.addi %c0_i32, %c2_i32 : i32
    %c1_i32 = arith.constant 1 : i32
    %9 = scf.for %arg8 = %c0_i32 to %8 step %c1_i32 iter_args(%arg9 = %7) -> (vector<16x4xf32>)  : i32 {
      %365 = arith.index_cast %arg8 : i32 to index
      %c0_144 = arith.constant 0 : index
      %c0_145 = arith.constant 0 : index
      %366 = vector.load %arg1[%365, %c0_144, %c0_145] : memref<2x16x256xf32, #tpu.memory_space<vmem>>, vector<1x16x256xf32>
      %367 = vector.shape_cast %366 : vector<1x16x256xf32> to vector<16x256xf32>
      %cst_146 = arith.constant dense<0.000000e+00> : vector<16xf32>
      %368 = vector.multi_reduction <add>, %367, %cst_146 [1] : vector<16x256xf32> to vector<16xf32>
      %369 = vector.shape_cast %368 : vector<16xf32> to vector<16x1xf32>
      %cst_147 = arith.constant 2.560000e+02 : f32
      %370 = vector.broadcast %cst_147 : f32 to vector<16x1xf32>
      %371 = arith.divf %369, %370 : vector<16x1xf32>
      %cst_148 = arith.constant dense<0xFF800000> : vector<16xf32>
      %372 = vector.multi_reduction <maximumf>, %367, %cst_148 [1] : vector<16x256xf32> to vector<16xf32>
      %373 = vector.shape_cast %372 : vector<16xf32> to vector<16x1xf32>
      %374 = vector.broadcast %arg8 : i32 to vector<16x4xi32>
      %375 = arith.cmpi eq, %6, %374 : vector<16x4xi32>
      %376 = vector.shape_cast %371 : vector<16x1xf32> to vector<16x1xf32>
      %377 = vector.broadcast %376 : vector<16x1xf32> to vector<16x4xf32>
      %378 = arith.select %375, %377, %arg9 : vector<16x4xi1>, vector<16x4xf32>
      %c2_i32_149 = arith.constant 2 : i32
      %379 = arith.addi %c2_i32_149, %arg8 : i32
      %380 = vector.broadcast %379 : i32 to vector<16x4xi32>
      %381 = arith.cmpi eq, %6, %380 : vector<16x4xi32>
      %382 = vector.shape_cast %373 : vector<16x1xf32> to vector<16x1xf32>
      %383 = vector.broadcast %382 : vector<16x1xf32> to vector<16x4xf32>
      %384 = arith.select %381, %383, %378 : vector<16x4xi1>, vector<16x4xf32>
      scf.yield %384 : vector<16x4xf32>
    }
    %c2_i32_8 = arith.constant 2 : i32
    %cst_9 = arith.constant dense<0.000000e+00> : vector<2x4xf32>
    %10 = tpu.matmul %0, %9, %cst_9 {dimension_numbers = #tpu.dot_dimension_numbers<[1], [0], [0], [1], [0, 0, 1, 1], [], []>} : vector<2x16xf32>, vector<16x4xf32>, vector<2x4xf32> -> vector<2x4xf32>
    %cst_10 = arith.constant 0.000000e+00 : f32
    %11 = vector.broadcast %cst_10 : f32 to vector<2x4xf32>
    %12 = arith.maximumf %10, %11 : vector<2x4xf32>
    %13 = vector.extract_strided_slice %12 {offsets = [0, 0], sizes = [2, 2], strides = [1, 1]} : vector<2x4xf32> to vector<2x2xf32>
    %14 = vector.extract_strided_slice %12 {offsets = [0, 2], sizes = [2, 2], strides = [1, 1]} : vector<2x4xf32> to vector<2x2xf32>
    %15 = arith.addf %13, %14 : vector<2x2xf32>
    %cst_11 = arith.constant dense<0.000000e+00> : vector<16x2xf32>
    %16 = tpu.matmul %1, %15, %cst_11 {dimension_numbers = #tpu.dot_dimension_numbers<[1], [0], [0], [1], [0, 0, 1, 1], [], []>} : vector<16x2xf32>, vector<2x2xf32>, vector<16x2xf32> -> vector<16x2xf32>
    %17 = arith.negf %16 : vector<16x2xf32>
    %18 = math.exp %17 : vector<16x2xf32>
    %cst_12 = arith.constant 1.000000e+00 : f32
    %19 = vector.broadcast %cst_12 : f32 to vector<16x2xf32>
    %20 = arith.addf %19, %18 : vector<16x2xf32>
    %21 = arith.divf %19, %20 : vector<16x2xf32>
    %22 = tpu.iota {dimensions = array<i32: 1>} : vector<16x2xi32>
    %c0_i32_13 = arith.constant 0 : i32
    %c2_i32_14 = arith.constant 2 : i32
    %23 = arith.addi %c0_i32_13, %c2_i32_14 : i32
    %c1_i32_15 = arith.constant 1 : i32
    scf.for %arg8 = %c0_i32_13 to %23 step %c1_i32_15  : i32 {
      %365 = arith.index_cast %arg8 : i32 to index
      %c0_144 = arith.constant 0 : index
      %c0_145 = arith.constant 0 : index
      %366 = vector.load %arg1[%365, %c0_144, %c0_145] : memref<2x16x256xf32, #tpu.memory_space<vmem>>, vector<1x16x256xf32>
      %367 = vector.shape_cast %366 : vector<1x16x256xf32> to vector<16x256xf32>
      %368 = vector.broadcast %arg8 : i32 to vector<16x2xi32>
      %369 = arith.cmpi eq, %22, %368 : vector<16x2xi32>
      %cst_146 = arith.constant 0.000000e+00 : f32
      %370 = vector.broadcast %cst_146 : f32 to vector<16x2xf32>
      %371 = arith.select %369, %21, %370 : vector<16x2xi1>, vector<16x2xf32>
      %cst_147 = arith.constant dense<0.000000e+00> : vector<16xf32>
      %372 = vector.multi_reduction <add>, %371, %cst_147 [1] : vector<16x2xf32> to vector<16xf32>
      %373 = vector.shape_cast %372 : vector<16xf32> to vector<16x1xf32>
      %374 = vector.broadcast %373 : vector<16x1xf32> to vector<16x256xf32>
      %375 = arith.mulf %367, %374 : vector<16x256xf32>
      %cst_148 = arith.constant dense<0.000000e+00> : vector<256xf32>
      %376 = vector.multi_reduction <add>, %375, %cst_148 [0] : vector<16x256xf32> to vector<256xf32>
      %377 = vector.shape_cast %376 : vector<256xf32> to vector<1x256xf32>
      %cst_149 = arith.constant 1.600000e+01 : f32
      %378 = vector.broadcast %cst_149 : f32 to vector<1x256xf32>
      %379 = arith.divf %377, %378 : vector<1x256xf32>
      %380 = arith.index_cast %arg8 : i32 to index
      %c128_150 = arith.constant 128 : index
      %381 = vector.load %arg6[%380, %c128_150] : memref<4x512xf32, #tpu.memory_space<vmem>>, vector<1x256xf32>
      tpu.vector_store %arg6[%380, %c128_150], %379 {strides = array<i32>} : memref<4x512xf32, #tpu.memory_space<vmem>>, vector<1x256xf32>,
      %cst_151 = arith.constant dense<0xFF800000> : vector<256xf32>
      %382 = vector.multi_reduction <maximumf>, %375, %cst_151 [0] : vector<16x256xf32> to vector<256xf32>
      %383 = vector.shape_cast %382 : vector<256xf32> to vector<1x256xf32>
      %c2_i32_152 = arith.constant 2 : i32
      %384 = arith.addi %c2_i32_152, %arg8 : i32
      %385 = arith.index_cast %384 : i32 to index
      %c128_153 = arith.constant 128 : index
      %386 = vector.load %arg6[%385, %c128_153] : memref<4x512xf32, #tpu.memory_space<vmem>>, vector<1x256xf32>
      tpu.vector_store %arg6[%385, %c128_153], %383 {strides = array<i32>} : memref<4x512xf32, #tpu.memory_space<vmem>>, vector<1x256xf32>,
    }
    %c2_i32_16 = arith.constant 2 : i32
    %24 = tpu.iota {dimensions = array<i32: 1>} : vector<1x256xi32>
    %c16_i32 = arith.constant 16 : i32
    %c0_i32_17 = arith.constant 0 : i32
    %25 = arith.cmpi eq, %c16_i32, %c0_i32_17 : i32
    %c1_i32_18 = arith.constant 1 : i32
    %26 = arith.select %25, %c1_i32_18, %c16_i32 : i32
    %27 = vector.broadcast %26 : i32 to vector<1x256xi32>
    %28 = arith.remsi %24, %27 : vector<1x256xi32>
    %c0_i32_19 = arith.constant 0 : i32
    %29 = vector.broadcast %c0_i32_19 : i32 to vector<1x256xi32>
    %30 = arith.cmpi ne, %28, %29 : vector<1x256xi32>
    %c0_i32_20 = arith.constant 0 : i32
    %31 = vector.broadcast %c0_i32_20 : i32 to vector<1x256xi32>
    %32 = arith.cmpi slt, %28, %31 : vector<1x256xi32>
    %c0_i32_21 = arith.constant 0 : i32
    %33 = arith.cmpi slt, %26, %c0_i32_21 : i32
    %34 = vector.broadcast %33 : i1 to vector<1x256xi1>
    %35 = vector.broadcast %34 : vector<1x256xi1> to vector<1x256xi1>
    %36 = arith.xori %32, %35 : vector<1x256xi1>
    %37 = arith.andi %36, %30 : vector<1x256xi1>
    %38 = vector.broadcast %26 : i32 to vector<1x256xi32>
    %39 = arith.addi %28, %38 : vector<1x256xi32>
    %40 = arith.select %37, %39, %28 : vector<1x256xi1>, vector<1x256xi32>
    %cst_22 = arith.constant 0.000000e+00 : f32
    %41 = vector.broadcast %cst_22 : f32 to vector<4x256xf32>
    %cst_23 = arith.constant 0.000000e+00 : f32
    %42 = vector.broadcast %cst_23 : f32 to vector<4x256xf32>
    %c0_24 = arith.constant 0 : index
    %c0_25 = arith.constant 0 : index
    %43 = vector.load %arg4[%c0_24, %c0_25] : memref<4x49xf32, #tpu.memory_space<vmem>>, vector<4x1xf32>
    %c0_26 = arith.constant 0 : index
    %c77 = arith.constant 77 : index
    %44 = vector.load %arg6[%c0_26, %c77] : memref<4x512xf32, #tpu.memory_space<vmem>>, vector<4x256xf32>
    %45 = vector.broadcast %43 : vector<4x1xf32> to vector<4x256xf32>
    %46 = arith.mulf %45, %44 : vector<4x256xf32>
    %47 = arith.addf %42, %46 : vector<4x256xf32>
    %c0_27 = arith.constant 0 : index
    %c7 = arith.constant 7 : index
    %48 = vector.load %arg4[%c0_27, %c7] : memref<4x49xf32, #tpu.memory_space<vmem>>, vector<4x1xf32>
    %c0_28 = arith.constant 0 : index
    %c93 = arith.constant 93 : index
    %49 = vector.load %arg6[%c0_28, %c93] : memref<4x512xf32, #tpu.memory_space<vmem>>, vector<4x256xf32>
    %50 = vector.broadcast %48 : vector<4x1xf32> to vector<4x256xf32>
    %51 = arith.mulf %50, %49 : vector<4x256xf32>
    %52 = arith.addf %47, %51 : vector<4x256xf32>
    %c0_29 = arith.constant 0 : index
    %c14 = arith.constant 14 : index
    %53 = vector.load %arg4[%c0_29, %c14] : memref<4x49xf32, #tpu.memory_space<vmem>>, vector<4x1xf32>
    %c0_30 = arith.constant 0 : index
    %c109 = arith.constant 109 : index
    %54 = vector.load %arg6[%c0_30, %c109] : memref<4x512xf32, #tpu.memory_space<vmem>>, vector<4x256xf32>
    %55 = vector.broadcast %53 : vector<4x1xf32> to vector<4x256xf32>
    %56 = arith.mulf %55, %54 : vector<4x256xf32>
    %57 = arith.addf %52, %56 : vector<4x256xf32>
    %c0_31 = arith.constant 0 : index
    %c21 = arith.constant 21 : index
    %58 = vector.load %arg4[%c0_31, %c21] : memref<4x49xf32, #tpu.memory_space<vmem>>, vector<4x1xf32>
    %c0_32 = arith.constant 0 : index
    %c125 = arith.constant 125 : index
    %59 = vector.load %arg6[%c0_32, %c125] : memref<4x512xf32, #tpu.memory_space<vmem>>, vector<4x256xf32>
    %60 = vector.broadcast %58 : vector<4x1xf32> to vector<4x256xf32>
    %61 = arith.mulf %60, %59 : vector<4x256xf32>
    %62 = arith.addf %57, %61 : vector<4x256xf32>
    %c0_33 = arith.constant 0 : index
    %c28 = arith.constant 28 : index
    %63 = vector.load %arg4[%c0_33, %c28] : memref<4x49xf32, #tpu.memory_space<vmem>>, vector<4x1xf32>
    %c0_34 = arith.constant 0 : index
    %c141 = arith.constant 141 : index
    %64 = vector.load %arg6[%c0_34, %c141] : memref<4x512xf32, #tpu.memory_space<vmem>>, vector<4x256xf32>
    %65 = vector.broadcast %63 : vector<4x1xf32> to vector<4x256xf32>
    %66 = arith.mulf %65, %64 : vector<4x256xf32>
    %67 = arith.addf %62, %66 : vector<4x256xf32>
    %c0_35 = arith.constant 0 : index
    %c35 = arith.constant 35 : index
    %68 = vector.load %arg4[%c0_35, %c35] : memref<4x49xf32, #tpu.memory_space<vmem>>, vector<4x1xf32>
    %c0_36 = arith.constant 0 : index
    %c157 = arith.constant 157 : index
    %69 = vector.load %arg6[%c0_36, %c157] : memref<4x512xf32, #tpu.memory_space<vmem>>, vector<4x256xf32>
    %70 = vector.broadcast %68 : vector<4x1xf32> to vector<4x256xf32>
    %71 = arith.mulf %70, %69 : vector<4x256xf32>
    %72 = arith.addf %67, %71 : vector<4x256xf32>
    %c0_37 = arith.constant 0 : index
    %c42 = arith.constant 42 : index
    %73 = vector.load %arg4[%c0_37, %c42] : memref<4x49xf32, #tpu.memory_space<vmem>>, vector<4x1xf32>
    %c0_38 = arith.constant 0 : index
    %c173 = arith.constant 173 : index
    %74 = vector.load %arg6[%c0_38, %c173] : memref<4x512xf32, #tpu.memory_space<vmem>>, vector<4x256xf32>
    %75 = vector.broadcast %73 : vector<4x1xf32> to vector<4x256xf32>
    %76 = arith.mulf %75, %74 : vector<4x256xf32>
    %77 = arith.addf %72, %76 : vector<4x256xf32>
    %c3_i32 = arith.constant 3 : i32
    %78 = vector.broadcast %c3_i32 : i32 to vector<1x256xi32>
    %79 = arith.cmpi sge, %40, %78 : vector<1x256xi32>
    %c19_i32 = arith.constant 19 : i32
    %80 = vector.broadcast %c19_i32 : i32 to vector<1x256xi32>
    %81 = arith.cmpi slt, %40, %80 : vector<1x256xi32>
    %82 = arith.andi %79, %81 : vector<1x256xi1>
    %cst_39 = arith.constant 0.000000e+00 : f32
    %83 = vector.shape_cast %82 : vector<1x256xi1> to vector<1x256xi1>
    %84 = vector.broadcast %83 : vector<1x256xi1> to vector<4x256xi1>
    %85 = vector.broadcast %cst_39 : f32 to vector<4x256xf32>
    %86 = arith.select %84, %77, %85 : vector<4x256xi1>, vector<4x256xf32>
    %87 = arith.addf %41, %86 : vector<4x256xf32>
    %cst_40 = arith.constant 0.000000e+00 : f32
    %88 = vector.broadcast %cst_40 : f32 to vector<4x256xf32>
    %c0_41 = arith.constant 0 : index
    %c1 = arith.constant 1 : index
    %89 = vector.load %arg4[%c0_41, %c1] : memref<4x49xf32, #tpu.memory_space<vmem>>, vector<4x1xf32>
    %c0_42 = arith.constant 0 : index
    %c78 = arith.constant 78 : index
    %90 = vector.load %arg6[%c0_42, %c78] : memref<4x512xf32, #tpu.memory_space<vmem>>, vector<4x256xf32>
    %91 = vector.broadcast %89 : vector<4x1xf32> to vector<4x256xf32>
    %92 = arith.mulf %91, %90 : vector<4x256xf32>
    %93 = arith.addf %88, %92 : vector<4x256xf32>
    %c0_43 = arith.constant 0 : index
    %c8 = arith.constant 8 : index
    %94 = vector.load %arg4[%c0_43, %c8] : memref<4x49xf32, #tpu.memory_space<vmem>>, vector<4x1xf32>
    %c0_44 = arith.constant 0 : index
    %c94 = arith.constant 94 : index
    %95 = vector.load %arg6[%c0_44, %c94] : memref<4x512xf32, #tpu.memory_space<vmem>>, vector<4x256xf32>
    %96 = vector.broadcast %94 : vector<4x1xf32> to vector<4x256xf32>
    %97 = arith.mulf %96, %95 : vector<4x256xf32>
    %98 = arith.addf %93, %97 : vector<4x256xf32>
    %c0_45 = arith.constant 0 : index
    %c15 = arith.constant 15 : index
    %99 = vector.load %arg4[%c0_45, %c15] : memref<4x49xf32, #tpu.memory_space<vmem>>, vector<4x1xf32>
    %c0_46 = arith.constant 0 : index
    %c110 = arith.constant 110 : index
    %100 = vector.load %arg6[%c0_46, %c110] : memref<4x512xf32, #tpu.memory_space<vmem>>, vector<4x256xf32>
    %101 = vector.broadcast %99 : vector<4x1xf32> to vector<4x256xf32>
    %102 = arith.mulf %101, %100 : vector<4x256xf32>
    %103 = arith.addf %98, %102 : vector<4x256xf32>
    %c0_47 = arith.constant 0 : index
    %c22 = arith.constant 22 : index
    %104 = vector.load %arg4[%c0_47, %c22] : memref<4x49xf32, #tpu.memory_space<vmem>>, vector<4x1xf32>
    %c0_48 = arith.constant 0 : index
    %c126 = arith.constant 126 : index
    %105 = vector.load %arg6[%c0_48, %c126] : memref<4x512xf32, #tpu.memory_space<vmem>>, vector<4x256xf32>
    %106 = vector.broadcast %104 : vector<4x1xf32> to vector<4x256xf32>
    %107 = arith.mulf %106, %105 : vector<4x256xf32>
    %108 = arith.addf %103, %107 : vector<4x256xf32>
    %c0_49 = arith.constant 0 : index
    %c29 = arith.constant 29 : index
    %109 = vector.load %arg4[%c0_49, %c29] : memref<4x49xf32, #tpu.memory_space<vmem>>, vector<4x1xf32>
    %c0_50 = arith.constant 0 : index
    %c142 = arith.constant 142 : index
    %110 = vector.load %arg6[%c0_50, %c142] : memref<4x512xf32, #tpu.memory_space<vmem>>, vector<4x256xf32>
    %111 = vector.broadcast %109 : vector<4x1xf32> to vector<4x256xf32>
    %112 = arith.mulf %111, %110 : vector<4x256xf32>
    %113 = arith.addf %108, %112 : vector<4x256xf32>
    %c0_51 = arith.constant 0 : index
    %c36 = arith.constant 36 : index
    %114 = vector.load %arg4[%c0_51, %c36] : memref<4x49xf32, #tpu.memory_space<vmem>>, vector<4x1xf32>
    %c0_52 = arith.constant 0 : index
    %c158 = arith.constant 158 : index
    %115 = vector.load %arg6[%c0_52, %c158] : memref<4x512xf32, #tpu.memory_space<vmem>>, vector<4x256xf32>
    %116 = vector.broadcast %114 : vector<4x1xf32> to vector<4x256xf32>
    %117 = arith.mulf %116, %115 : vector<4x256xf32>
    %118 = arith.addf %113, %117 : vector<4x256xf32>
    %c0_53 = arith.constant 0 : index
    %c43 = arith.constant 43 : index
    %119 = vector.load %arg4[%c0_53, %c43] : memref<4x49xf32, #tpu.memory_space<vmem>>, vector<4x1xf32>
    %c0_54 = arith.constant 0 : index
    %c174 = arith.constant 174 : index
    %120 = vector.load %arg6[%c0_54, %c174] : memref<4x512xf32, #tpu.memory_space<vmem>>, vector<4x256xf32>
    %121 = vector.broadcast %119 : vector<4x1xf32> to vector<4x256xf32>
    %122 = arith.mulf %121, %120 : vector<4x256xf32>
    %123 = arith.addf %118, %122 : vector<4x256xf32>
    %c2_i32_55 = arith.constant 2 : i32
    %124 = vector.broadcast %c2_i32_55 : i32 to vector<1x256xi32>
    %125 = arith.cmpi sge, %40, %124 : vector<1x256xi32>
    %c18_i32 = arith.constant 18 : i32
    %126 = vector.broadcast %c18_i32 : i32 to vector<1x256xi32>
    %127 = arith.cmpi slt, %40, %126 : vector<1x256xi32>
    %128 = arith.andi %125, %127 : vector<1x256xi1>
    %cst_56 = arith.constant 0.000000e+00 : f32
    %129 = vector.shape_cast %128 : vector<1x256xi1> to vector<1x256xi1>
    %130 = vector.broadcast %129 : vector<1x256xi1> to vector<4x256xi1>
    %131 = vector.broadcast %cst_56 : f32 to vector<4x256xf32>
    %132 = arith.select %130, %123, %131 : vector<4x256xi1>, vector<4x256xf32>
    %133 = arith.addf %87, %132 : vector<4x256xf32>
    %cst_57 = arith.constant 0.000000e+00 : f32
    %134 = vector.broadcast %cst_57 : f32 to vector<4x256xf32>
    %c0_58 = arith.constant 0 : index
    %c2 = arith.constant 2 : index
    %135 = vector.load %arg4[%c0_58, %c2] : memref<4x49xf32, #tpu.memory_space<vmem>>, vector<4x1xf32>
    %c0_59 = arith.constant 0 : index
    %c79 = arith.constant 79 : index
    %136 = vector.load %arg6[%c0_59, %c79] : memref<4x512xf32, #tpu.memory_space<vmem>>, vector<4x256xf32>
    %137 = vector.broadcast %135 : vector<4x1xf32> to vector<4x256xf32>
    %138 = arith.mulf %137, %136 : vector<4x256xf32>
    %139 = arith.addf %134, %138 : vector<4x256xf32>
    %c0_60 = arith.constant 0 : index
    %c9 = arith.constant 9 : index
    %140 = vector.load %arg4[%c0_60, %c9] : memref<4x49xf32, #tpu.memory_space<vmem>>, vector<4x1xf32>
    %c0_61 = arith.constant 0 : index
    %c95 = arith.constant 95 : index
    %141 = vector.load %arg6[%c0_61, %c95] : memref<4x512xf32, #tpu.memory_space<vmem>>, vector<4x256xf32>
    %142 = vector.broadcast %140 : vector<4x1xf32> to vector<4x256xf32>
    %143 = arith.mulf %142, %141 : vector<4x256xf32>
    %144 = arith.addf %139, %143 : vector<4x256xf32>
    %c0_62 = arith.constant 0 : index
    %c16 = arith.constant 16 : index
    %145 = vector.load %arg4[%c0_62, %c16] : memref<4x49xf32, #tpu.memory_space<vmem>>, vector<4x1xf32>
    %c0_63 = arith.constant 0 : index
    %c111 = arith.constant 111 : index
    %146 = vector.load %arg6[%c0_63, %c111] : memref<4x512xf32, #tpu.memory_space<vmem>>, vector<4x256xf32>
    %147 = vector.broadcast %145 : vector<4x1xf32> to vector<4x256xf32>
    %148 = arith.mulf %147, %146 : vector<4x256xf32>
    %149 = arith.addf %144, %148 : vector<4x256xf32>
    %c0_64 = arith.constant 0 : index
    %c23 = arith.constant 23 : index
    %150 = vector.load %arg4[%c0_64, %c23] : memref<4x49xf32, #tpu.memory_space<vmem>>, vector<4x1xf32>
    %c0_65 = arith.constant 0 : index
    %c127 = arith.constant 127 : index
    %151 = vector.load %arg6[%c0_65, %c127] : memref<4x512xf32, #tpu.memory_space<vmem>>, vector<4x256xf32>
    %152 = vector.broadcast %150 : vector<4x1xf32> to vector<4x256xf32>
    %153 = arith.mulf %152, %151 : vector<4x256xf32>
    %154 = arith.addf %149, %153 : vector<4x256xf32>
    %c0_66 = arith.constant 0 : index
    %c30 = arith.constant 30 : index
    %155 = vector.load %arg4[%c0_66, %c30] : memref<4x49xf32, #tpu.memory_space<vmem>>, vector<4x1xf32>
    %c0_67 = arith.constant 0 : index
    %c143 = arith.constant 143 : index
    %156 = vector.load %arg6[%c0_67, %c143] : memref<4x512xf32, #tpu.memory_space<vmem>>, vector<4x256xf32>
    %157 = vector.broadcast %155 : vector<4x1xf32> to vector<4x256xf32>
    %158 = arith.mulf %157, %156 : vector<4x256xf32>
    %159 = arith.addf %154, %158 : vector<4x256xf32>
    %c0_68 = arith.constant 0 : index
    %c37 = arith.constant 37 : index
    %160 = vector.load %arg4[%c0_68, %c37] : memref<4x49xf32, #tpu.memory_space<vmem>>, vector<4x1xf32>
    %c0_69 = arith.constant 0 : index
    %c159 = arith.constant 159 : index
    %161 = vector.load %arg6[%c0_69, %c159] : memref<4x512xf32, #tpu.memory_space<vmem>>, vector<4x256xf32>
    %162 = vector.broadcast %160 : vector<4x1xf32> to vector<4x256xf32>
    %163 = arith.mulf %162, %161 : vector<4x256xf32>
    %164 = arith.addf %159, %163 : vector<4x256xf32>
    %c0_70 = arith.constant 0 : index
    %c44 = arith.constant 44 : index
    %165 = vector.load %arg4[%c0_70, %c44] : memref<4x49xf32, #tpu.memory_space<vmem>>, vector<4x1xf32>
    %c0_71 = arith.constant 0 : index
    %c175 = arith.constant 175 : index
    %166 = vector.load %arg6[%c0_71, %c175] : memref<4x512xf32, #tpu.memory_space<vmem>>, vector<4x256xf32>
    %167 = vector.broadcast %165 : vector<4x1xf32> to vector<4x256xf32>
    %168 = arith.mulf %167, %166 : vector<4x256xf32>
    %169 = arith.addf %164, %168 : vector<4x256xf32>
    %c1_i32_72 = arith.constant 1 : i32
    %170 = vector.broadcast %c1_i32_72 : i32 to vector<1x256xi32>
    %171 = arith.cmpi sge, %40, %170 : vector<1x256xi32>
    %c17_i32 = arith.constant 17 : i32
    %172 = vector.broadcast %c17_i32 : i32 to vector<1x256xi32>
    %173 = arith.cmpi slt, %40, %172 : vector<1x256xi32>
    %174 = arith.andi %171, %173 : vector<1x256xi1>
    %cst_73 = arith.constant 0.000000e+00 : f32
    %175 = vector.shape_cast %174 : vector<1x256xi1> to vector<1x256xi1>
    %176 = vector.broadcast %175 : vector<1x256xi1> to vector<4x256xi1>
    %177 = vector.broadcast %cst_73 : f32 to vector<4x256xf32>
    %178 = arith.select %176, %169, %177 : vector<4x256xi1>, vector<4x256xf32>
    %179 = arith.addf %133, %178 : vector<4x256xf32>
    %cst_74 = arith.constant 0.000000e+00 : f32
    %180 = vector.broadcast %cst_74 : f32 to vector<4x256xf32>
    %c0_75 = arith.constant 0 : index
    %c3 = arith.constant 3 : index
    %181 = vector.load %arg4[%c0_75, %c3] : memref<4x49xf32, #tpu.memory_space<vmem>>, vector<4x1xf32>
    %c0_76 = arith.constant 0 : index
    %c80 = arith.constant 80 : index
    %182 = vector.load %arg6[%c0_76, %c80] : memref<4x512xf32, #tpu.memory_space<vmem>>, vector<4x256xf32>
    %183 = vector.broadcast %181 : vector<4x1xf32> to vector<4x256xf32>
    %184 = arith.mulf %183, %182 : vector<4x256xf32>
    %185 = arith.addf %180, %184 : vector<4x256xf32>
    %c0_77 = arith.constant 0 : index
    %c10 = arith.constant 10 : index
    %186 = vector.load %arg4[%c0_77, %c10] : memref<4x49xf32, #tpu.memory_space<vmem>>, vector<4x1xf32>
    %c0_78 = arith.constant 0 : index
    %c96 = arith.constant 96 : index
    %187 = vector.load %arg6[%c0_78, %c96] : memref<4x512xf32, #tpu.memory_space<vmem>>, vector<4x256xf32>
    %188 = vector.broadcast %186 : vector<4x1xf32> to vector<4x256xf32>
    %189 = arith.mulf %188, %187 : vector<4x256xf32>
    %190 = arith.addf %185, %189 : vector<4x256xf32>
    %c0_79 = arith.constant 0 : index
    %c17 = arith.constant 17 : index
    %191 = vector.load %arg4[%c0_79, %c17] : memref<4x49xf32, #tpu.memory_space<vmem>>, vector<4x1xf32>
    %c0_80 = arith.constant 0 : index
    %c112 = arith.constant 112 : index
    %192 = vector.load %arg6[%c0_80, %c112] : memref<4x512xf32, #tpu.memory_space<vmem>>, vector<4x256xf32>
    %193 = vector.broadcast %191 : vector<4x1xf32> to vector<4x256xf32>
    %194 = arith.mulf %193, %192 : vector<4x256xf32>
    %195 = arith.addf %190, %194 : vector<4x256xf32>
    %c0_81 = arith.constant 0 : index
    %c24 = arith.constant 24 : index
    %196 = vector.load %arg4[%c0_81, %c24] : memref<4x49xf32, #tpu.memory_space<vmem>>, vector<4x1xf32>
    %c0_82 = arith.constant 0 : index
    %c128 = arith.constant 128 : index
    %197 = vector.load %arg6[%c0_82, %c128] : memref<4x512xf32, #tpu.memory_space<vmem>>, vector<4x256xf32>
    %198 = vector.broadcast %196 : vector<4x1xf32> to vector<4x256xf32>
    %199 = arith.mulf %198, %197 : vector<4x256xf32>
    %200 = arith.addf %195, %199 : vector<4x256xf32>
    %c0_83 = arith.constant 0 : index
    %c31 = arith.constant 31 : index
    %201 = vector.load %arg4[%c0_83, %c31] : memref<4x49xf32, #tpu.memory_space<vmem>>, vector<4x1xf32>
    %c0_84 = arith.constant 0 : index
    %c144 = arith.constant 144 : index
    %202 = vector.load %arg6[%c0_84, %c144] : memref<4x512xf32, #tpu.memory_space<vmem>>, vector<4x256xf32>
    %203 = vector.broadcast %201 : vector<4x1xf32> to vector<4x256xf32>
    %204 = arith.mulf %203, %202 : vector<4x256xf32>
    %205 = arith.addf %200, %204 : vector<4x256xf32>
    %c0_85 = arith.constant 0 : index
    %c38 = arith.constant 38 : index
    %206 = vector.load %arg4[%c0_85, %c38] : memref<4x49xf32, #tpu.memory_space<vmem>>, vector<4x1xf32>
    %c0_86 = arith.constant 0 : index
    %c160 = arith.constant 160 : index
    %207 = vector.load %arg6[%c0_86, %c160] : memref<4x512xf32, #tpu.memory_space<vmem>>, vector<4x256xf32>
    %208 = vector.broadcast %206 : vector<4x1xf32> to vector<4x256xf32>
    %209 = arith.mulf %208, %207 : vector<4x256xf32>
    %210 = arith.addf %205, %209 : vector<4x256xf32>
    %c0_87 = arith.constant 0 : index
    %c45 = arith.constant 45 : index
    %211 = vector.load %arg4[%c0_87, %c45] : memref<4x49xf32, #tpu.memory_space<vmem>>, vector<4x1xf32>
    %c0_88 = arith.constant 0 : index
    %c176 = arith.constant 176 : index
    %212 = vector.load %arg6[%c0_88, %c176] : memref<4x512xf32, #tpu.memory_space<vmem>>, vector<4x256xf32>
    %213 = vector.broadcast %211 : vector<4x1xf32> to vector<4x256xf32>
    %214 = arith.mulf %213, %212 : vector<4x256xf32>
    %215 = arith.addf %210, %214 : vector<4x256xf32>
    %216 = arith.addf %179, %215 : vector<4x256xf32>
    %cst_89 = arith.constant 0.000000e+00 : f32
    %217 = vector.broadcast %cst_89 : f32 to vector<4x256xf32>
    %c0_90 = arith.constant 0 : index
    %c4 = arith.constant 4 : index
    %218 = vector.load %arg4[%c0_90, %c4] : memref<4x49xf32, #tpu.memory_space<vmem>>, vector<4x1xf32>
    %c0_91 = arith.constant 0 : index
    %c81 = arith.constant 81 : index
    %219 = vector.load %arg6[%c0_91, %c81] : memref<4x512xf32, #tpu.memory_space<vmem>>, vector<4x256xf32>
    %220 = vector.broadcast %218 : vector<4x1xf32> to vector<4x256xf32>
    %221 = arith.mulf %220, %219 : vector<4x256xf32>
    %222 = arith.addf %217, %221 : vector<4x256xf32>
    %c0_92 = arith.constant 0 : index
    %c11 = arith.constant 11 : index
    %223 = vector.load %arg4[%c0_92, %c11] : memref<4x49xf32, #tpu.memory_space<vmem>>, vector<4x1xf32>
    %c0_93 = arith.constant 0 : index
    %c97 = arith.constant 97 : index
    %224 = vector.load %arg6[%c0_93, %c97] : memref<4x512xf32, #tpu.memory_space<vmem>>, vector<4x256xf32>
    %225 = vector.broadcast %223 : vector<4x1xf32> to vector<4x256xf32>
    %226 = arith.mulf %225, %224 : vector<4x256xf32>
    %227 = arith.addf %222, %226 : vector<4x256xf32>
    %c0_94 = arith.constant 0 : index
    %c18 = arith.constant 18 : index
    %228 = vector.load %arg4[%c0_94, %c18] : memref<4x49xf32, #tpu.memory_space<vmem>>, vector<4x1xf32>
    %c0_95 = arith.constant 0 : index
    %c113 = arith.constant 113 : index
    %229 = vector.load %arg6[%c0_95, %c113] : memref<4x512xf32, #tpu.memory_space<vmem>>, vector<4x256xf32>
    %230 = vector.broadcast %228 : vector<4x1xf32> to vector<4x256xf32>
    %231 = arith.mulf %230, %229 : vector<4x256xf32>
    %232 = arith.addf %227, %231 : vector<4x256xf32>
    %c0_96 = arith.constant 0 : index
    %c25 = arith.constant 25 : index
    %233 = vector.load %arg4[%c0_96, %c25] : memref<4x49xf32, #tpu.memory_space<vmem>>, vector<4x1xf32>
    %c0_97 = arith.constant 0 : index
    %c129 = arith.constant 129 : index
    %234 = vector.load %arg6[%c0_97, %c129] : memref<4x512xf32, #tpu.memory_space<vmem>>, vector<4x256xf32>
    %235 = vector.broadcast %233 : vector<4x1xf32> to vector<4x256xf32>
    %236 = arith.mulf %235, %234 : vector<4x256xf32>
    %237 = arith.addf %232, %236 : vector<4x256xf32>
    %c0_98 = arith.constant 0 : index
    %c32 = arith.constant 32 : index
    %238 = vector.load %arg4[%c0_98, %c32] : memref<4x49xf32, #tpu.memory_space<vmem>>, vector<4x1xf32>
    %c0_99 = arith.constant 0 : index
    %c145 = arith.constant 145 : index
    %239 = vector.load %arg6[%c0_99, %c145] : memref<4x512xf32, #tpu.memory_space<vmem>>, vector<4x256xf32>
    %240 = vector.broadcast %238 : vector<4x1xf32> to vector<4x256xf32>
    %241 = arith.mulf %240, %239 : vector<4x256xf32>
    %242 = arith.addf %237, %241 : vector<4x256xf32>
    %c0_100 = arith.constant 0 : index
    %c39 = arith.constant 39 : index
    %243 = vector.load %arg4[%c0_100, %c39] : memref<4x49xf32, #tpu.memory_space<vmem>>, vector<4x1xf32>
    %c0_101 = arith.constant 0 : index
    %c161 = arith.constant 161 : index
    %244 = vector.load %arg6[%c0_101, %c161] : memref<4x512xf32, #tpu.memory_space<vmem>>, vector<4x256xf32>
    %245 = vector.broadcast %243 : vector<4x1xf32> to vector<4x256xf32>
    %246 = arith.mulf %245, %244 : vector<4x256xf32>
    %247 = arith.addf %242, %246 : vector<4x256xf32>
    %c0_102 = arith.constant 0 : index
    %c46 = arith.constant 46 : index
    %248 = vector.load %arg4[%c0_102, %c46] : memref<4x49xf32, #tpu.memory_space<vmem>>, vector<4x1xf32>
    %c0_103 = arith.constant 0 : index
    %c177 = arith.constant 177 : index
    %249 = vector.load %arg6[%c0_103, %c177] : memref<4x512xf32, #tpu.memory_space<vmem>>, vector<4x256xf32>
    %250 = vector.broadcast %248 : vector<4x1xf32> to vector<4x256xf32>
    %251 = arith.mulf %250, %249 : vector<4x256xf32>
    %252 = arith.addf %247, %251 : vector<4x256xf32>
    %c-1_i32 = arith.constant -1 : i32
    %253 = vector.broadcast %c-1_i32 : i32 to vector<1x256xi32>
    %254 = arith.cmpi sge, %40, %253 : vector<1x256xi32>
    %c15_i32 = arith.constant 15 : i32
    %255 = vector.broadcast %c15_i32 : i32 to vector<1x256xi32>
    %256 = arith.cmpi slt, %40, %255 : vector<1x256xi32>
    %257 = arith.andi %254, %256 : vector<1x256xi1>
    %cst_104 = arith.constant 0.000000e+00 : f32
    %258 = vector.shape_cast %257 : vector<1x256xi1> to vector<1x256xi1>
    %259 = vector.broadcast %258 : vector<1x256xi1> to vector<4x256xi1>
    %260 = vector.broadcast %cst_104 : f32 to vector<4x256xf32>
    %261 = arith.select %259, %252, %260 : vector<4x256xi1>, vector<4x256xf32>
    %262 = arith.addf %216, %261 : vector<4x256xf32>
    %cst_105 = arith.constant 0.000000e+00 : f32
    %263 = vector.broadcast %cst_105 : f32 to vector<4x256xf32>
    %c0_106 = arith.constant 0 : index
    %c5 = arith.constant 5 : index
    %264 = vector.load %arg4[%c0_106, %c5] : memref<4x49xf32, #tpu.memory_space<vmem>>, vector<4x1xf32>
    %c0_107 = arith.constant 0 : index
    %c82 = arith.constant 82 : index
    %265 = vector.load %arg6[%c0_107, %c82] : memref<4x512xf32, #tpu.memory_space<vmem>>, vector<4x256xf32>
    %266 = vector.broadcast %264 : vector<4x1xf32> to vector<4x256xf32>
    %267 = arith.mulf %266, %265 : vector<4x256xf32>
    %268 = arith.addf %263, %267 : vector<4x256xf32>
    %c0_108 = arith.constant 0 : index
    %c12 = arith.constant 12 : index
    %269 = vector.load %arg4[%c0_108, %c12] : memref<4x49xf32, #tpu.memory_space<vmem>>, vector<4x1xf32>
    %c0_109 = arith.constant 0 : index
    %c98 = arith.constant 98 : index
    %270 = vector.load %arg6[%c0_109, %c98] : memref<4x512xf32, #tpu.memory_space<vmem>>, vector<4x256xf32>
    %271 = vector.broadcast %269 : vector<4x1xf32> to vector<4x256xf32>
    %272 = arith.mulf %271, %270 : vector<4x256xf32>
    %273 = arith.addf %268, %272 : vector<4x256xf32>
    %c0_110 = arith.constant 0 : index
    %c19 = arith.constant 19 : index
    %274 = vector.load %arg4[%c0_110, %c19] : memref<4x49xf32, #tpu.memory_space<vmem>>, vector<4x1xf32>
    %c0_111 = arith.constant 0 : index
    %c114 = arith.constant 114 : index
    %275 = vector.load %arg6[%c0_111, %c114] : memref<4x512xf32, #tpu.memory_space<vmem>>, vector<4x256xf32>
    %276 = vector.broadcast %274 : vector<4x1xf32> to vector<4x256xf32>
    %277 = arith.mulf %276, %275 : vector<4x256xf32>
    %278 = arith.addf %273, %277 : vector<4x256xf32>
    %c0_112 = arith.constant 0 : index
    %c26 = arith.constant 26 : index
    %279 = vector.load %arg4[%c0_112, %c26] : memref<4x49xf32, #tpu.memory_space<vmem>>, vector<4x1xf32>
    %c0_113 = arith.constant 0 : index
    %c130 = arith.constant 130 : index
    %280 = vector.load %arg6[%c0_113, %c130] : memref<4x512xf32, #tpu.memory_space<vmem>>, vector<4x256xf32>
    %281 = vector.broadcast %279 : vector<4x1xf32> to vector<4x256xf32>
    %282 = arith.mulf %281, %280 : vector<4x256xf32>
    %283 = arith.addf %278, %282 : vector<4x256xf32>
    %c0_114 = arith.constant 0 : index
    %c33 = arith.constant 33 : index
    %284 = vector.load %arg4[%c0_114, %c33] : memref<4x49xf32, #tpu.memory_space<vmem>>, vector<4x1xf32>
    %c0_115 = arith.constant 0 : index
    %c146 = arith.constant 146 : index
    %285 = vector.load %arg6[%c0_115, %c146] : memref<4x512xf32, #tpu.memory_space<vmem>>, vector<4x256xf32>
    %286 = vector.broadcast %284 : vector<4x1xf32> to vector<4x256xf32>
    %287 = arith.mulf %286, %285 : vector<4x256xf32>
    %288 = arith.addf %283, %287 : vector<4x256xf32>
    %c0_116 = arith.constant 0 : index
    %c40 = arith.constant 40 : index
    %289 = vector.load %arg4[%c0_116, %c40] : memref<4x49xf32, #tpu.memory_space<vmem>>, vector<4x1xf32>
    %c0_117 = arith.constant 0 : index
    %c162 = arith.constant 162 : index
    %290 = vector.load %arg6[%c0_117, %c162] : memref<4x512xf32, #tpu.memory_space<vmem>>, vector<4x256xf32>
    %291 = vector.broadcast %289 : vector<4x1xf32> to vector<4x256xf32>
    %292 = arith.mulf %291, %290 : vector<4x256xf32>
    %293 = arith.addf %288, %292 : vector<4x256xf32>
    %c0_118 = arith.constant 0 : index
    %c47 = arith.constant 47 : index
    %294 = vector.load %arg4[%c0_118, %c47] : memref<4x49xf32, #tpu.memory_space<vmem>>, vector<4x1xf32>
    %c0_119 = arith.constant 0 : index
    %c178 = arith.constant 178 : index
    %295 = vector.load %arg6[%c0_119, %c178] : memref<4x512xf32, #tpu.memory_space<vmem>>, vector<4x256xf32>
    %296 = vector.broadcast %294 : vector<4x1xf32> to vector<4x256xf32>
    %297 = arith.mulf %296, %295 : vector<4x256xf32>
    %298 = arith.addf %293, %297 : vector<4x256xf32>
    %c-2_i32 = arith.constant -2 : i32
    %299 = vector.broadcast %c-2_i32 : i32 to vector<1x256xi32>
    %300 = arith.cmpi sge, %40, %299 : vector<1x256xi32>
    %c14_i32 = arith.constant 14 : i32
    %301 = vector.broadcast %c14_i32 : i32 to vector<1x256xi32>
    %302 = arith.cmpi slt, %40, %301 : vector<1x256xi32>
    %303 = arith.andi %300, %302 : vector<1x256xi1>
    %cst_120 = arith.constant 0.000000e+00 : f32
    %304 = vector.shape_cast %303 : vector<1x256xi1> to vector<1x256xi1>
    %305 = vector.broadcast %304 : vector<1x256xi1> to vector<4x256xi1>
    %306 = vector.broadcast %cst_120 : f32 to vector<4x256xf32>
    %307 = arith.select %305, %298, %306 : vector<4x256xi1>, vector<4x256xf32>
    %308 = arith.addf %262, %307 : vector<4x256xf32>
    %cst_121 = arith.constant 0.000000e+00 : f32
    %309 = vector.broadcast %cst_121 : f32 to vector<4x256xf32>
    %c0_122 = arith.constant 0 : index
    %c6 = arith.constant 6 : index
    %310 = vector.load %arg4[%c0_122, %c6] : memref<4x49xf32, #tpu.memory_space<vmem>>, vector<4x1xf32>
    %c0_123 = arith.constant 0 : index
    %c83 = arith.constant 83 : index
    %311 = vector.load %arg6[%c0_123, %c83] : memref<4x512xf32, #tpu.memory_space<vmem>>, vector<4x256xf32>
    %312 = vector.broadcast %310 : vector<4x1xf32> to vector<4x256xf32>
    %313 = arith.mulf %312, %311 : vector<4x256xf32>
    %314 = arith.addf %309, %313 : vector<4x256xf32>
    %c0_124 = arith.constant 0 : index
    %c13 = arith.constant 13 : index
    %315 = vector.load %arg4[%c0_124, %c13] : memref<4x49xf32, #tpu.memory_space<vmem>>, vector<4x1xf32>
    %c0_125 = arith.constant 0 : index
    %c99 = arith.constant 99 : index
    %316 = vector.load %arg6[%c0_125, %c99] : memref<4x512xf32, #tpu.memory_space<vmem>>, vector<4x256xf32>
    %317 = vector.broadcast %315 : vector<4x1xf32> to vector<4x256xf32>
    %318 = arith.mulf %317, %316 : vector<4x256xf32>
    %319 = arith.addf %314, %318 : vector<4x256xf32>
    %c0_126 = arith.constant 0 : index
    %c20 = arith.constant 20 : index
    %320 = vector.load %arg4[%c0_126, %c20] : memref<4x49xf32, #tpu.memory_space<vmem>>, vector<4x1xf32>
    %c0_127 = arith.constant 0 : index
    %c115 = arith.constant 115 : index
    %321 = vector.load %arg6[%c0_127, %c115] : memref<4x512xf32, #tpu.memory_space<vmem>>, vector<4x256xf32>
    %322 = vector.broadcast %320 : vector<4x1xf32> to vector<4x256xf32>
    %323 = arith.mulf %322, %321 : vector<4x256xf32>
    %324 = arith.addf %319, %323 : vector<4x256xf32>
    %c0_128 = arith.constant 0 : index
    %c27 = arith.constant 27 : index
    %325 = vector.load %arg4[%c0_128, %c27] : memref<4x49xf32, #tpu.memory_space<vmem>>, vector<4x1xf32>
    %c0_129 = arith.constant 0 : index
    %c131 = arith.constant 131 : index
    %326 = vector.load %arg6[%c0_129, %c131] : memref<4x512xf32, #tpu.memory_space<vmem>>, vector<4x256xf32>
    %327 = vector.broadcast %325 : vector<4x1xf32> to vector<4x256xf32>
    %328 = arith.mulf %327, %326 : vector<4x256xf32>
    %329 = arith.addf %324, %328 : vector<4x256xf32>
    %c0_130 = arith.constant 0 : index
    %c34 = arith.constant 34 : index
    %330 = vector.load %arg4[%c0_130, %c34] : memref<4x49xf32, #tpu.memory_space<vmem>>, vector<4x1xf32>
    %c0_131 = arith.constant 0 : index
    %c147 = arith.constant 147 : index
    %331 = vector.load %arg6[%c0_131, %c147] : memref<4x512xf32, #tpu.memory_space<vmem>>, vector<4x256xf32>
    %332 = vector.broadcast %330 : vector<4x1xf32> to vector<4x256xf32>
    %333 = arith.mulf %332, %331 : vector<4x256xf32>
    %334 = arith.addf %329, %333 : vector<4x256xf32>
    %c0_132 = arith.constant 0 : index
    %c41 = arith.constant 41 : index
    %335 = vector.load %arg4[%c0_132, %c41] : memref<4x49xf32, #tpu.memory_space<vmem>>, vector<4x1xf32>
    %c0_133 = arith.constant 0 : index
    %c163 = arith.constant 163 : index
    %336 = vector.load %arg6[%c0_133, %c163] : memref<4x512xf32, #tpu.memory_space<vmem>>, vector<4x256xf32>
    %337 = vector.broadcast %335 : vector<4x1xf32> to vector<4x256xf32>
    %338 = arith.mulf %337, %336 : vector<4x256xf32>
    %339 = arith.addf %334, %338 : vector<4x256xf32>
    %c0_134 = arith.constant 0 : index
    %c48 = arith.constant 48 : index
    %340 = vector.load %arg4[%c0_134, %c48] : memref<4x49xf32, #tpu.memory_space<vmem>>, vector<4x1xf32>
    %c0_135 = arith.constant 0 : index
    %c179 = arith.constant 179 : index
    %341 = vector.load %arg6[%c0_135, %c179] : memref<4x512xf32, #tpu.memory_space<vmem>>, vector<4x256xf32>
    %342 = vector.broadcast %340 : vector<4x1xf32> to vector<4x256xf32>
    %343 = arith.mulf %342, %341 : vector<4x256xf32>
    %344 = arith.addf %339, %343 : vector<4x256xf32>
    %c-3_i32 = arith.constant -3 : i32
    %345 = vector.broadcast %c-3_i32 : i32 to vector<1x256xi32>
    %346 = arith.cmpi sge, %40, %345 : vector<1x256xi32>
    %c13_i32 = arith.constant 13 : i32
    %347 = vector.broadcast %c13_i32 : i32 to vector<1x256xi32>
    %348 = arith.cmpi slt, %40, %347 : vector<1x256xi32>
    %349 = arith.andi %346, %348 : vector<1x256xi1>
    %cst_136 = arith.constant 0.000000e+00 : f32
    %350 = vector.shape_cast %349 : vector<1x256xi1> to vector<1x256xi1>
    %351 = vector.broadcast %350 : vector<1x256xi1> to vector<4x256xi1>
    %352 = vector.broadcast %cst_136 : f32 to vector<4x256xf32>
    %353 = arith.select %351, %344, %352 : vector<4x256xi1>, vector<4x256xf32>
    %354 = arith.addf %308, %353 : vector<4x256xf32>
    %355 = vector.extract_strided_slice %354 {offsets = [0, 0], sizes = [2, 256], strides = [1, 1]} : vector<4x256xf32> to vector<2x256xf32>
    %356 = vector.extract_strided_slice %354 {offsets = [2, 0], sizes = [2, 256], strides = [1, 1]} : vector<4x256xf32> to vector<2x256xf32>
    %357 = arith.addf %355, %356 : vector<2x256xf32>
    %358 = arith.negf %357 : vector<2x256xf32>
    %359 = math.exp %358 : vector<2x256xf32>
    %cst_137 = arith.constant 1.000000e+00 : f32
    %360 = vector.broadcast %cst_137 : f32 to vector<2x256xf32>
    %361 = arith.addf %360, %359 : vector<2x256xf32>
    %362 = arith.divf %360, %361 : vector<2x256xf32>
    %c0_138 = arith.constant 0 : index
    %c0_139 = arith.constant 0 : index
    %363 = vector.load %arg7[%c0_138, %c0_139] : memref<2x256xf32, #tpu.memory_space<vmem>>, vector<2x256xf32>
    tpu.vector_store %arg7[%c0_138, %c0_139], %362 {strides = array<i32>} : memref<2x256xf32, #tpu.memory_space<vmem>>, vector<2x256xf32>,
    %c0_i32_140 = arith.constant 0 : i32
    %c2_i32_141 = arith.constant 2 : i32
    %364 = arith.addi %c0_i32_140, %c2_i32_141 : i32
    %c1_i32_142 = arith.constant 1 : i32
    scf.for %arg8 = %c0_i32_140 to %364 step %c1_i32_142  : i32 {
      %365 = arith.index_cast %arg8 : i32 to index
      %c0_144 = arith.constant 0 : index
      %c0_145 = arith.constant 0 : index
      %366 = vector.load %arg1[%365, %c0_144, %c0_145] : memref<2x16x256xf32, #tpu.memory_space<vmem>>, vector<1x16x256xf32>
      %367 = vector.shape_cast %366 : vector<1x16x256xf32> to vector<16x256xf32>
      %368 = arith.index_cast %arg8 : i32 to index
      %c0_146 = arith.constant 0 : index
      %369 = vector.load %arg7[%368, %c0_146] : memref<2x256xf32, #tpu.memory_space<vmem>>, vector<1x256xf32>
      %370 = vector.broadcast %arg8 : i32 to vector<16x2xi32>
      %371 = arith.cmpi eq, %22, %370 : vector<16x2xi32>
      %cst_147 = arith.constant 0.000000e+00 : f32
      %372 = vector.broadcast %cst_147 : f32 to vector<16x2xf32>
      %373 = arith.select %371, %21, %372 : vector<16x2xi1>, vector<16x2xf32>
      %cst_148 = arith.constant dense<0.000000e+00> : vector<16xf32>
      %374 = vector.multi_reduction <add>, %373, %cst_148 [1] : vector<16x2xf32> to vector<16xf32>
      %375 = vector.shape_cast %374 : vector<16xf32> to vector<16x1xf32>
      %376 = vector.broadcast %375 : vector<16x1xf32> to vector<16x256xf32>
      %377 = arith.mulf %367, %376 : vector<16x256xf32>
      %378 = vector.broadcast %369 : vector<1x256xf32> to vector<16x256xf32>
      %379 = arith.mulf %377, %378 : vector<16x256xf32>
      %380 = arith.index_cast %arg8 : i32 to index
      %c0_149 = arith.constant 0 : index
      %c0_150 = arith.constant 0 : index
      %381 = vector.load %arg5[%380, %c0_149, %c0_150] : memref<2x16x256xf32, #tpu.memory_space<vmem>>, vector<1x16x256xf32>
      %382 = vector.shape_cast %381 : vector<1x16x256xf32> to vector<16x256xf32>
      %383 = vector.shape_cast %379 : vector<16x256xf32> to vector<1x16x256xf32>
      tpu.vector_store %arg5[%380, %c0_149, %c0_150], %383 {strides = array<i32>} : memref<2x16x256xf32, #tpu.memory_space<vmem>>, vector<1x16x256xf32>,
    }
    %c2_i32_143 = arith.constant 2 : i32
    return
  }
  func.func @transform_0(%arg0: i32) -> (i32, i32, i32) {
    %c0_i32 = arith.constant 0 : i32
    %c0_i32_0 = arith.constant 0 : i32
    %c0_i32_1 = arith.constant 0 : i32
    return %arg0, %c0_i32, %c0_i32_0 : i32, i32, i32
  }
  func.func @transform_1(%arg0: i32) -> (i32, i32) {
    %c0_i32 = arith.constant 0 : i32
    %c0_i32_0 = arith.constant 0 : i32
    %c0_i32_1 = arith.constant 0 : i32
    return %c0_i32, %c0_i32_0 : i32, i32
  }
  func.func @transform_2(%arg0: i32) -> (i32, i32) {
    %c0_i32 = arith.constant 0 : i32
    %c0_i32_0 = arith.constant 0 : i32
    %c0_i32_1 = arith.constant 0 : i32
    return %c0_i32, %c0_i32_0 : i32, i32
  }
  func.func @transform_3(%arg0: i32) -> (i32, i32) {
    %c0_i32 = arith.constant 0 : i32
    %c0_i32_0 = arith.constant 0 : i32
    %c0_i32_1 = arith.constant 0 : i32
    return %c0_i32, %c0_i32_0 : i32, i32
  }
  func.func @transform_4(%arg0: i32) -> (i32, i32, i32) {
    %c0_i32 = arith.constant 0 : i32
    %c0_i32_0 = arith.constant 0 : i32
    %c0_i32_1 = arith.constant 0 : i32
    return %arg0, %c0_i32, %c0_i32_0 : i32, i32, i32
  }
}

</mosaic_0001>

<llo_original>
// kernel: tpu_custom_call.1
$region0: #{tpu_custom_call.1}
  #allocation0 [shape = 'u32[]', space=smem, size = 0x4, offset = 0x4, fixed_abs, tag = 'smem constant byte address 0x4 - core index']
  #allocation1 [shape = 'u32[144,128]{1,0:T(1,128)}', space=vmem, size = 0x12000, scoped, tag = 'internal scratch']
  #allocation2 [shape = 'f32[4,512]{1,0:T(4,128)}', space=vmem, size = 0x2000, scoped, tag = 'scratch operand']
  #allocation3 [shape = 'f32[2,256]{1,0:T(2,128)}', space=vmem, size = 0x800, scoped, tag = 'scratch operand']
  %s0 = inlined_call_operand.hbm [shape: f32[4,16,256], index: 0, kind: input, shape index: {}]
  %s1 = inlined_call_operand.vmem [shape: f32[2,16], index: 1, kind: input, shape index: {}]
  %s2 = inlined_call_operand.vmem [shape: f32[16,2], index: 2, kind: input, shape index: {}]
  %s3 = inlined_call_operand.vmem [shape: f32[4,49], index: 3, kind: input, shape index: {}]
  %s4 = inlined_call_operand.hbm [shape: f32[4,16,256], index: 4, kind: output, shape index: {}]
  %s5 = sld [smem:[#allocation0]]
  $region74: #{tpu_custom_call.1} parent=0
    _
  %s7 = ssub.s32 1, %s5
  %s8 = scalar_select 0, %s7, %s5
  $region1: #{tpu_custom_call.1} parent=0
    #allocation4 [shape = 'u8[65536]{0}', space=vmem, size = 0x10000, scoped, tag = 'input window, operand 0']
    #allocation5 [shape = 's32[2]{0}', space=sflag, size = 0x8, scoped, tag = 'scoped memory for tpu_custom_call.1']
    #allocation6 [shape = 's32[2]{0}', space=sflag, size = 0x8, scoped, tag = 'scoped memory for tpu_custom_call.1']
    #allocation7 [shape = 'u8[65536]{0}', space=vmem, size = 0x10000, scoped, tag = 'output window, operand 0']
    %9 = vsyncpa [#allocation5], 0
    %s10 = scalar_lea.sflag [#allocation5], 1
    %11 = vsyncpa %s10, 0
    %12 = vsyncpa [#allocation6], 0
    %s13 = scalar_lea.sflag [#allocation6], 1
    %14 = vsyncpa %s13, 0
    loop: start=0, step=1, limit=4
    $region2: #{tpu_custom_call.1} parent=1 // loop_pre_header
      _
    $region3: #{tpu_custom_call.1} parent=1 // loop_header
      %s16 = sphi 0, %s20
      %p17 = scmp.ge.s32.totalorder %s16, 4
      %s26 = sphi 0, %s28
      %s29 = sphi 0, %s26
      %s30 = sphi 0, %s29
      %s46 = sphi 0, %s30
      %s50 = sphi 0, %s50
      %s52 = sphi 0, %s50
      %s53 = sphi 0, %s52
      %s67 = sphi 0, %s53
      %s71 = sphi 0, %s71
      %s73 = sphi 0, %s71
      %s74 = sphi 0, %s73
      %s88 = sphi 0, %s74
      %s92 = sphi 0, %s92
      %s94 = sphi 0, %s92
      %s95 = sphi 0, %s94
      %s109 = sphi 0, %s95
      %s115 = sphi 0, %s117
      %s118 = sphi 0, %s115
      %s119 = sphi 0, %s118
      %s135 = sphi 0, %s119
    $region4: #{tpu_custom_call.1} parent=1 // loop_header_branch
      %19 = sbr.rel (%p17) target = $region8
    $region5: #{tpu_custom_call.1} parent=1 // loop_body
      %s21 = ssub.s32 %s16, 1
      %s22 = ssub.s32 %s16, 2
      %s23 = sadd.s32 %s16, 1
      %s24 = ssub.s32 %s16, %s23
      %p25 = scmp.eq.s32.totalorder %s24, 0
      %s27 = sadd.s32 %s26, 1
      %s28 = scalar_select %p25, %s26, %s27
      %p31 = pneg %p25
      %p32 = scmp.eq.s32.totalorder %s16, 1
      %p33 = por %p31, %p32
      %p34 = scmp.ne.s32.totalorder %s26, %s29
      %p35 = scmp.eq.s32.totalorder %s16, 0
      %p36 = por %p34, %p35
      %p37 = scmp.ne.s32.totalorder %s26, %s29
      %p38 = scmp.eq.s32.totalorder %s21, 1
      %p39 = por %p37, %p38
      %p40 = scmp.ne.s32.totalorder %s29, %s30
      %p41 = scmp.eq.s32.totalorder %s21, 0
      %p42 = por %p40, %p41
      %p43 = scmp.ne.s32.totalorder %s29, %s30
      %p44 = scmp.eq.s32.totalorder %s22, 1
      %p45 = por %p43, %p44
      %p47 = scmp.ne.s32.totalorder %s30, %s46
      %p48 = scmp.eq.s32.totalorder %s22, 0
      %p49 = por %p47, %p48
      %s51 = sadd.s32 %s50, 1
      %p54 = scmp.eq.s32.totalorder %s16, 1
      %p55 = scmp.ne.s32.totalorder %s50, %s52
      %p56 = scmp.eq.s32.totalorder %s16, 0
      %p57 = por %p55, %p56
      %p58 = scmp.ne.s32.totalorder %s50, %s52
      %p59 = scmp.eq.s32.totalorder %s21, 1
      %p60 = por %p58, %p59
      %p61 = scmp.ne.s32.totalorder %s52, %s53
      %p62 = scmp.eq.s32.totalorder %s21, 0
      %p63 = por %p61, %p62
      %p64 = scmp.ne.s32.totalorder %s52, %s53
      %p65 = scmp.eq.s32.totalorder %s22, 1
      %p66 = por %p64, %p65
      %p68 = scmp.ne.s32.totalorder %s53, %s67
      %p69 = scmp.eq.s32.totalorder %s22, 0
      %p70 = por %p68, %p69
      %s72 = sadd.s32 %s71, 1
      %p75 = scmp.eq.s32.totalorder %s16, 1
      %p76 = scmp.ne.s32.totalorder %s71, %s73
      %p77 = scmp.eq.s32.totalorder %s16, 0
      %p78 = por %p76, %p77
      %p79 = scmp.ne.s32.totalorder %s71, %s73
      %p80 = scmp.eq.s32.totalorder %s21, 1
      %p81 = por %p79, %p80
      %p82 = scmp.ne.s32.totalorder %s73, %s74
      %p83 = scmp.eq.s32.totalorder %s21, 0
      %p84 = por %p82, %p83
      %p85 = scmp.ne.s32.totalorder %s73, %s74
      %p86 = scmp.eq.s32.totalorder %s22, 1
      %p87 = por %p85, %p86
      %p89 = scmp.ne.s32.totalorder %s74, %s88
      %p90 = scmp.eq.s32.totalorder %s22, 0
      %p91 = por %p89, %p90
      %s93 = sadd.s32 %s92, 1
      %p96 = scmp.eq.s32.totalorder %s16, 1
      %p97 = scmp.ne.s32.totalorder %s92, %s94
      %p98 = scmp.eq.s32.totalorder %s16, 0
      %p99 = por %p97, %p98
      %p100 = scmp.ne.s32.totalorder %s92, %s94
      %p101 = scmp.eq.s32.totalorder %s21, 1
      %p102 = por %p100, %p101
      %p103 = scmp.ne.s32.totalorder %s94, %s95
      %p104 = scmp.eq.s32.totalorder %s21, 0
      %p105 = por %p103, %p104
      %p106 = scmp.ne.s32.totalorder %s94, %s95
      %p107 = scmp.eq.s32.totalorder %s22, 1
      %p108 = por %p106, %p107
      %p110 = scmp.ne.s32.totalorder %s95, %s109
      %p111 = scmp.eq.s32.totalorder %s22, 0
      %p112 = por %p110, %p111
      %s113 = ssub.s32 %s16, %s23
      %p114 = scmp.eq.s32.totalorder %s113, 0
      %s116 = sadd.s32 %s115, 1
      %s117 = scalar_select %p114, %s115, %s116
      %p120 = pneg %p114
      %p121 = scmp.eq.s32.totalorder %s16, 1
      %p122 = por %p120, %p121
      %p123 = scmp.ne.s32.totalorder %s115, %s118
      %p124 = scmp.eq.s32.totalorder %s16, 0
      %p125 = por %p123, %p124
      %p126 = scmp.ne.s32.totalorder %s115, %s118
      %p127 = scmp.eq.s32.totalorder %s21, 1
      %p128 = por %p126, %p127
      %p129 = scmp.ne.s32.totalorder %s118, %s119
      %p130 = scmp.eq.s32.totalorder %s21, 0
      %p131 = por %p129, %p130
      %p132 = scmp.ne.s32.totalorder %s118, %s119
      %p133 = scmp.eq.s32.totalorder %s22, 1
      %p134 = por %p132, %p133
      %p136 = scmp.ne.s32.totalorder %s119, %s135
      %p137 = scmp.eq.s32.totalorder %s22, 0
      %p138 = por %p136, %p137
      %p139 = scmp.le.s32.totalorder 1, %s16
      %p140 = scmp.lt.s32.totalorder %s16, 3
      %p141 = pnand %p139, %p140
      %p142 = pneg %p141
      // Predicated region
      $region9: #{tpu_custom_call.1} parent=5 // pred_check
        _
      $region10: #{tpu_custom_call.1} parent=5 // pred_check_branch
        %144 = sbr.rel (%p141) target = $region12
      $region11: #{tpu_custom_call.1} parent=5 // pred_region
        %s145 = ssub.s32 %s16, 1
        // Predicated region
        $region13: #{tpu_custom_call.1} parent=11 // pred_check
          %p146 = pneg %p63
        $region14: #{tpu_custom_call.1} parent=11 // pred_check_branch
          %148 = sbr.rel (%p146) target = $region16
        $region15: #{tpu_custom_call.1} parent=11 // pred_region
          _
        $region16: #{tpu_custom_call.1} parent=11 // pred_fallthru
          _
        // Predicated region
        $region17: #{tpu_custom_call.1} parent=11 // pred_check
          %p149 = pneg %p84
        $region18: #{tpu_custom_call.1} parent=11 // pred_check_branch
          %151 = sbr.rel (%p149) target = $region20
        $region19: #{tpu_custom_call.1} parent=11 // pred_region
          _
        $region20: #{tpu_custom_call.1} parent=11 // pred_fallthru
          _
        // Predicated region
        $region21: #{tpu_custom_call.1} parent=11 // pred_check
          %p152 = pneg %p105
        $region22: #{tpu_custom_call.1} parent=11 // pred_check_branch
          %154 = sbr.rel (%p152) target = $region24
        $region23: #{tpu_custom_call.1} parent=11 // pred_region
          _
        $region24: #{tpu_custom_call.1} parent=11 // pred_fallthru
          _
      $region12: #{tpu_custom_call.1} parent=5 // pred_fallthru
        _
      %p155 = scmp.lt.s32.totalorder %s16, 2
      // Predicated region
      $region25: #{tpu_custom_call.1} parent=5 // pred_check
        %p156 = pneg %p155
      $region26: #{tpu_custom_call.1} parent=5 // pred_check_branch
        %158 = sbr.rel (%p156) target = $region28
      $region27: #{tpu_custom_call.1} parent=5 // pred_region
        // Predicated region
        $region29: #{tpu_custom_call.1} parent=27 // pred_check
          %p159 = pneg %p36
        $region30: #{tpu_custom_call.1} parent=27 // pred_check_branch
          %161 = sbr.rel (%p159) target = $region32
        $region31: #{tpu_custom_call.1} parent=27 // pred_region
          %s162 = sand.u32 %s26, 1
          %s163 = scalar_lea.sflag [#allocation5], %s162
          %s164 = sand.u32 %s26, 1
          %s165 = smul.addr %s164, 64
          %s166 = scalar_lea.vmem [#allocation4], %s165
          %s167 = smul.u32 2, %s16
          %s169 = ssub.s32 1024, 1024
          %170 = vsyncadd %s163, %s169
          %s171 = smul.addr %s167, 4
          %s172 = smul.addr %s171, 128
          %s173 = scalar_lea.hbm %s0, %s172
          %s174 = sshll.u32 %s166, 4
          %s175 = int_to_ptr.vmem [resolvable:$true] %s174
          %180 = dma.hbm_to_vmem [thread:$0]  %s173, 1024, %s175, %s163, 256, 256, 16
        $region32: #{tpu_custom_call.1} parent=27 // pred_fallthru
          _
      $region28: #{tpu_custom_call.1} parent=5 // pred_fallthru
        _
      %p181 = scmp.le.s32.totalorder 1, %s16
      %p182 = scmp.lt.s32.totalorder %s16, 3
      %p183 = pnand %p181, %p182
      %p184 = pneg %p183
      // Predicated region
      $region33: #{tpu_custom_call.1} parent=5 // pred_check
        _
      $region34: #{tpu_custom_call.1} parent=5 // pred_check_branch
        %186 = sbr.rel (%p183) target = $region36
      $region35: #{tpu_custom_call.1} parent=5 // pred_region
        %s187 = ssub.s32 %s16, 1
        %s188 = sand.u32 %s29, 1
        %s189 = scalar_lea.sflag [#allocation5], %s188
        %s190 = sand.u32 %s29, 1
        %s191 = smul.addr %s190, 64
        %s192 = scalar_lea.vmem [#allocation4], %s191
        // Predicated region
        $region37: #{tpu_custom_call.1} parent=35 // pred_check
          %p193 = pneg %p42
        $region38: #{tpu_custom_call.1} parent=35 // pred_check_branch
          %195 = sbr.rel (%p193) target = $region40
        $region39: #{tpu_custom_call.1} parent=35 // pred_region
          %196 = dma.done %s189, 1024
        $region40: #{tpu_custom_call.1} parent=35 // pred_fallthru
          _
        %s197 = sand.u32 %s29, 1
        %s198 = scalar_lea.sflag [#allocation5], %s197
        %s199 = sand.u32 %s29, 1
        %s200 = smul.addr %s199, 64
        %s201 = scalar_lea.vmem [#allocation4], %s200
        %p202 = pneg %p42
        %p203 = pneg %p39
        %p204 = pneg %p63
        %p205 = pneg %p60
        %p206 = pneg %p84
        %p207 = pneg %p81
        %p208 = pneg %p105
        %p209 = pneg %p102
        %p210 = pneg %p131
        %p211 = pneg %p128
        %s212 = sand.u32 %s118, 1
        %s213 = scalar_lea.sflag [#allocation6], %s212
        %s214 = sand.u32 %s118, 1
        %s215 = smul.addr %s214, 64
        %s216 = scalar_lea.vmem [#allocation7], %s215
        %s217 = smul.u32 2, %s21
        %s218 = smul.u32 2, %s21
        %v219 = vld [vmem:[%s1] sm:$0x3]
        %v220 = vld [vmem:[%s2] sm:$0xff]
        %v221 = vld [vmem:[%s2 + $0x8] sm:$0xff]
        %222 = vst [vmem:[#allocation2] sm:$0xf] 0.0
        %223 = vst [vmem:[#allocation2 + $0xc] sm:$0xf] 0.0
        %v224 = vlaneseq
        %v225 = vand.u32 %v224, 127
        loop: start=0, step=1, limit=2
        $region41: #{tpu_custom_call.1} parent=35 // loop_pre_header
          _
        $region42: #{tpu_custom_call.1} parent=35 // loop_header
          %s227 = sphi 0, %s231
          %p228 = scmp.ge.s32.totalorder %s227, 2
          %v232 = vphi 0.0, %v263
          %v233 = vphi 0.0, %v264
        $region43: #{tpu_custom_call.1} parent=35 // loop_header_branch
          %230 = sbr.rel (%p228) target = $region47
        $region44: #{tpu_custom_call.1} parent=35 // loop_body
          %s234 = smul.u32 %s227, 4
          %s235 = smul.addr %s234, 8
          %s236 = scalar_lea.vmem %s192, %s235 [#allocation4]
          %v237 = vld [vmem:[%s236] sm:$0xff]
          %v238 = vld [vmem:[%s236 + $0x8] sm:$0xff]
          %v239 = vld [vmem:[%s236 + $0x10] sm:$0xff]
          %v240 = vld [vmem:[%s236 + $0x18] sm:$0xff]
          %v241 = vadd.f32 %v237, %v238
          %242 = vadd.xlane.f32.xlu0 %v241
          %v243 = vpop.xlane.xlu0 %242
          %v244 = vadd.f32 %v239, %v240
          %245 = vadd.xlane.f32.xlu0 %v244
          %v246 = vpop.xlane.xlu0 %245
          %v247 = vrcp.pop 256.0
          %v248 = vmul.f32 %v243, %v247
          %v249 = vmul.f32 %v246, %v247
          %v250 = vmax.f32 %v237, %v238
          %251 = vmax.xlane.f32.xlu0 %v250
          %v252 = vpop.xlane.xlu0 %251
          %v253 = vmax.f32 %v239, %v240
          %254 = vmax.xlane.f32.xlu0 %v253
          %v255 = vpop.xlane.xlu0 %254
          %v256 = vstv %s227
          %vm257 = vcmp.eq.s32.totalorder %v225, %v256
          %v258 = vsel %vm257, %v248, %v232
          %v259 = vsel %vm257, %v249, %v233
          %s260 = sadd.s32 %s227, 2
          %v261 = vstv %s260
          %vm262 = vcmp.eq.s32.totalorder %v225, %v261
          %v263 = vsel %vm262, %v252, %v258
          %v264 = vsel %vm262, %v255, %v259
        $region45: #{tpu_custom_call.1} parent=35 // loop_footer
          %s231 = sadd.s32 1, %s227
        $region46: #{tpu_custom_call.1} parent=35 // loop_footer_branch
          %226 = sbr.rel target = $region42
        $region47: #{tpu_custom_call.1} parent=35 // loop_exit
          _
        %vm265 = vcmask 130048
        %v267 = vsel %vm265, %v219, 0
        %269 = vmatprep.subr.mxu0 0.0
        %270 = vmatpush1.msra.mxu0 %v232
        %271 = vmatprep.subr.mxu0 0.0
        %272 = vmatpush1.msra.mxu0 %v233
        %273 = vmatprep.subr.mxu0 0.0
        %274 = vmatpush1.msra.mxu0 0.0
        %275 = vmatprep.subr.mxu0 0.0
        %276 = vmatpush1.msra.mxu0 0.0
        %277 = vmatprep.subr.mxu0 0.0
        %278 = vmatpush1.msra.mxu0 0.0
        %279 = vmatprep.subr.mxu0 0.0
        %280 = vmatpush1.msra.mxu0 0.0
        %281 = vmatprep.subr.mxu0 0.0
        %282 = vmatpush1.msra.mxu0 0.0
        %283 = vmatprep.subr.mxu0 0.0
        %284 = vmatpush1.msra.mxu0 0.0
        %285 = vmatprep.subr.mxu0 0.0
        %286 = vmatpush1.msra.mxu0 0.0
        %287 = vmatprep.subr.mxu0 0.0
        %288 = vmatpush1.msra.mxu0 0.0
        %289 = vmatprep.subr.mxu0 0.0
        %290 = vmatpush1.msra.mxu0 0.0
        %291 = vmatprep.subr.mxu0 0.0
        %292 = vmatpush1.msra.mxu0 0.0
        %293 = vmatprep.subr.mxu0 0.0
        %294 = vmatpush1.msra.mxu0 0.0
        %295 = vmatprep.subr.mxu0 0.0
        %296 = vmatpush1.msra.mxu0 0.0
        %297 = vmatprep.subr.mxu0 0.0
        %298 = vmatpush1.msra.mxu0 0.0
        %299 = vmatprep.subr.mxu0 0.0
        %300 = vmatpush1.msra.mxu0 0.0
        %301 = vmatprep.subr.mxu0 0.0
        %302 = vmatpush1.msra.mxu0 0.0
        %303 = vmatprep.subr.mxu0 0.0
        %304 = vmatpush1.msra.mxu0 0.0
        %305 = vmatprep.subr.mxu0 0.0
        %306 = vmatpush1.msra.mxu0 0.0
        %307 = vmatprep.subr.mxu0 0.0
        %308 = vmatpush1.msra.mxu0 0.0
        %309 = vmatprep.subr.mxu0 0.0
        %310 = vmatpush1.msra.mxu0 0.0
        %311 = vmatprep.subr.mxu0 0.0
        %312 = vmatpush1.msra.mxu0 0.0
        %313 = vmatprep.subr.mxu0 0.0
        %314 = vmatpush1.msra.mxu0 0.0
        %315 = vmatprep.subr.mxu0 0.0
        %316 = vmatpush1.msra.mxu0 0.0
        %317 = vmatprep.subr.mxu0 0.0
        %318 = vmatpush1.msra.mxu0 0.0
        %319 = vmatprep.subr.mxu0 0.0
        %320 = vmatpush1.msra.mxu0 0.0
        %321 = vmatprep.subr.mxu0 0.0
        %322 = vmatpush1.msra.mxu0 0.0
        %323 = vmatprep.subr.mxu0 0.0
        %324 = vmatpush1.msra.mxu0 0.0
        %325 = vmatprep.subr.mxu0 0.0
        %326 = vmatpush1.msra.mxu0 0.0
        %327 = vmatprep.subr.mxu0 0.0
        %328 = vmatpush1.msra.mxu0 0.0
        %329 = vmatprep.subr.mxu0 0.0
        %330 = vmatpush1.msra.mxu0 0.0
        %331 = vmatprep.subr.mxu0 0.0
        %332 = vmatpush1.msra.mxu0 0.0
        %333 = vmatprep.mubr.f32.mxu0 0.0
        %334 = vmatmul.mubr.f32.gmra.mrb[0].mxu0 %v267
        %v335 = vpop.f32.mrb[0].mxu0
        %v336 = vadd.f32 0.0, %v335
        %v337 = vpop.f32.mrb[0].mxu0
        %338 = vdwg.mxu0
        %v339 = vmax.f32 %v336, 0.0
        %341 = vrot.lane.b32.xlu0 %v339, 126
        %v342 = vpop.permute.xlu0 %341
        %v344 = vadd.f32 %v339, %v342
        %vm345 = vcmask 15360
        %v347 = vsel %vm345, %v220, 0
        %v350 = vsel %vm345, %v221, 0
        %vm352 = vcmask 1041408
        %v354 = vsel %vm352, %v344, 0
        %356 = vmatprep.subr.mxu0 0.0
        %357 = vmatpush1.msra.mxu0 %v354
        %358 = vmatprep.subr.mxu0 0.0
        %359 = vmatpush1.msra.mxu0 0.0
        %360 = vmatprep.subr.mxu0 0.0
        %361 = vmatpush1.msra.mxu0 0.0
        %362 = vmatprep.subr.mxu0 0.0
        %363 = vmatpush1.msra.mxu0 0.0
        %364 = vmatprep.subr.mxu0 0.0
        %365 = vmatpush1.msra.mxu0 0.0
        %366 = vmatprep.subr.mxu0 0.0
        %367 = vmatpush1.msra.mxu0 0.0
        %368 = vmatprep.subr.mxu0 0.0
        %369 = vmatpush1.msra.mxu0 0.0
        %370 = vmatprep.subr.mxu0 0.0
        %371 = vmatpush1.msra.mxu0 0.0
        %372 = vmatprep.subr.mxu0 0.0
        %373 = vmatpush1.msra.mxu0 0.0
        %374 = vmatprep.subr.mxu0 0.0
        %375 = vmatpush1.msra.mxu0 0.0
        %376 = vmatprep.subr.mxu0 0.0
        %377 = vmatpush1.msra.mxu0 0.0
        %378 = vmatprep.subr.mxu0 0.0
        %379 = vmatpush1.msra.mxu0 0.0
        %380 = vmatprep.subr.mxu0 0.0
        %381 = vmatpush1.msra.mxu0 0.0
        %382 = vmatprep.subr.mxu0 0.0
        %383 = vmatpush1.msra.mxu0 0.0
        %384 = vmatprep.subr.mxu0 0.0
        %385 = vmatpush1.msra.mxu0 0.0
        %386 = vmatprep.subr.mxu0 0.0
        %387 = vmatpush1.msra.mxu0 0.0
        %388 = vmatprep.subr.mxu0 0.0
        %389 = vmatpush1.msra.mxu0 0.0
        %390 = vmatprep.subr.mxu0 0.0
        %391 = vmatpush1.msra.mxu0 0.0
        %392 = vmatprep.subr.mxu0 0.0
        %393 = vmatpush1.msra.mxu0 0.0
        %394 = vmatprep.subr.mxu0 0.0
        %395 = vmatpush1.msra.mxu0 0.0
        %396 = vmatprep.subr.mxu0 0.0
        %397 = vmatpush1.msra.mxu0 0.0
        %398 = vmatprep.subr.mxu0 0.0
        %399 = vmatpush1.msra.mxu0 0.0
        %400 = vmatprep.subr.mxu0 0.0
        %401 = vmatpush1.msra.mxu0 0.0
        %402 = vmatprep.subr.mxu0 0.0
        %403 = vmatpush1.msra.mxu0 0.0
        %404 = vmatprep.subr.mxu0 0.0
        %405 = vmatpush1.msra.mxu0 0.0
        %406 = vmatprep.subr.mxu0 0.0
        %407 = vmatpush1.msra.mxu0 0.0
        %408 = vmatprep.subr.mxu0 0.0
        %409 = vmatpush1.msra.mxu0 0.0
        %410 = vmatprep.subr.mxu0 0.0
        %411 = vmatpush1.msra.mxu0 0.0
        %412 = vmatprep.subr.mxu0 0.0
        %413 = vmatpush1.msra.mxu0 0.0
        %414 = vmatprep.subr.mxu0 0.0
        %415 = vmatpush1.msra.mxu0 0.0
        %416 = vmatprep.subr.mxu0 0.0
        %417 = vmatpush1.msra.mxu0 0.0
        %418 = vmatprep.subr.mxu0 0.0
        %419 = vmatpush1.msra.mxu0 0.0
        %420 = vmatprep.mubr.f32.mxu0 0.0
        %421 = vmatmul.mubr.f32.gmra.mrb[0].mxu0 %v347
        %v422 = vpop.f32.mrb[0].mxu0
        %v423 = vadd.f32 0.0, %v422
        %v424 = vpop.f32.mrb[0].mxu0
        %425 = vmatprep.mubr.f32.mxu0 0.0
        %426 = vmatmul.mubr.f32.gmra.mrb[0].mxu0 %v350
        %v427 = vpop.f32.mrb[0].mxu0
        %v428 = vadd.f32 0.0, %v427
        %v429 = vpop.f32.mrb[0].mxu0
        %430 = vdwg.mxu0
        %v431 = vxor.u32 %v423, 2147483648
        %v432 = vxor.u32 %v428, 2147483648
        %v433 = vmul.f32 %v431, 1.442695
        %v434 = vpow.pop %v433
        %v435 = vmul.f32 %v432, 1.442695
        %v436 = vpow.pop %v435
        %v437 = vadd.f32 %v434, 1.0
        %v438 = vadd.f32 %v436, 1.0
        %v439 = vrcp.pop %v437
        %v440 = vmul.f32 1.0, %v439
        %v441 = vrcp.pop %v438
        %v442 = vmul.f32 1.0, %v441
        loop: start=0, step=1, limit=2
        $region48: #{tpu_custom_call.1} parent=35 // loop_pre_header
          _
        $region49: #{tpu_custom_call.1} parent=35 // loop_header
          %s444 = sphi 0, %s448
          %p445 = scmp.ge.s32.totalorder %s444, 2
        $region50: #{tpu_custom_call.1} parent=35 // loop_header_branch
          %447 = sbr.rel (%p445) target = $region54
        $region51: #{tpu_custom_call.1} parent=35 // loop_body
          %s449 = smul.u32 %s444, 4
          %s450 = smul.addr %s449, 8
          %s451 = scalar_lea.vmem %s192, %s450 [#allocation4]
          %v452 = vld [vmem:[%s451] sm:$0xff]
          %v453 = vld [vmem:[%s451 + $0x8] sm:$0xff]
          %v454 = vld [vmem:[%s451 + $0x10] sm:$0xff]
          %v455 = vld [vmem:[%s451 + $0x18] sm:$0xff]
          %v456 = vstv %s444
          %vm457 = vcmp.eq.s32.totalorder %v225, %v456
          %v458 = vsel %vm457, %v440, 0.0
          %v459 = vsel %vm457, %v442, 0.0
          %v460 = vsel %vm345, %v458, 0.0
          %461 = vadd.xlane.f32.xlu0 %v460
          %v462 = vpop.xlane.xlu0 %461
          %v463 = vsel %vm345, %v459, 0.0
          %464 = vadd.xlane.f32.xlu0 %v463
          %v465 = vpop.xlane.xlu0 %464
          %v466 = vmul.f32 %v452, %v462
          %v467 = vmul.f32 %v453, %v462
          %v468 = vmul.f32 %v454, %v465
          %v469 = vmul.f32 %v455, %v465
          %v470 = vadd.f32 %v466, %v468
          %v471 = vrot.slane %v470, 4
          %v472 = vadd.f32 %v470, %v471
          %v473 = vrot.slane %v472, 2
          %v474 = vadd.f32 %v472, %v473
          %v475 = vrot.slane %v474, 1
          %v476 = vadd.f32 %v474, %v475
          %v477 = vadd.f32 %v467, %v469
          %v478 = vrot.slane %v477, 4
          %v479 = vadd.f32 %v477, %v478
          %v480 = vrot.slane %v479, 2
          %v481 = vadd.f32 %v479, %v480
          %v482 = vrot.slane %v481, 1
          %v483 = vadd.f32 %v481, %v482
          %v484 = vrcp.pop 16.0
          %v485 = vmul.f32 %v476, %v484
          %v486 = vmul.f32 %v483, %v484
          %v489 = vcombine.low %v485, %v486
          %v491 = vunpack.c.l.s4 1966171168
          %v492 = vunpack.c.0.s8 %v491
          %v493 = vlaneseq
          %v494 = vshrl.u32 %v493, 7
          %v495 = vsub.s32 %v492, %v494
          %v496 = vrot.slane %v489, %v495
          %v498 = vunpack.c.l.s4 1966171168
          %v499 = vunpack.c.0.s8 %v498
          %v500 = vlaneseq
          %v501 = vshrl.u32 %v500, 7
          %v502 = vsub.s32 %v499, %v501
          %v503 = vrot.slane %v496, %v502
          %v505 = vlaneseq
          %vm506 = vcmp.ge.s32.totalorder %v505, 0
          %vm507 = vcmp.lt.s32.totalorder %v505, 256
          %vm508 = vmand %vm506, %vm507
          %s509 = sshra.s32 %s444, 2
          %s510 = sand.u32 %s444, 3
          %s511 = sshra.s32 %s444, 2
          %s512 = sand.u32 %s444, 3
          %s513 = smul.u32 %s509, 4
          %s514 = sadd.s32 %s513, 1
          %s515 = smul.u32 %s514, 4
          %s516 = sadd.s32 %s515, %s512
          %s517 = scalar_lea.vmem [#allocation2], %s516
          %518 = vst.msk [vmem:[%s517] ss:$4 sm:$0x3] %vm508, %v503
          %v519 = vmax.f32 %v466, %v468
          %v520 = vrot.slane %v519, 4
          %v521 = vmax.f32 %v519, %v520
          %v522 = vrot.slane %v521, 2
          %v523 = vmax.f32 %v521, %v522
          %v524 = vrot.slane %v523, 1
          %v525 = vmax.f32 %v523, %v524
          %v526 = vmax.f32 %v467, %v469
          %v527 = vrot.slane %v526, 4
          %v528 = vmax.f32 %v526, %v527
          %v529 = vrot.slane %v528, 2
          %v530 = vmax.f32 %v528, %v529
          %v531 = vrot.slane %v530, 1
          %v532 = vmax.f32 %v530, %v531
          %s533 = sadd.s32 %s444, 2
          %v536 = vcombine.low %v525, %v532
          %v538 = vunpack.c.l.s4 1966171168
          %v539 = vunpack.c.0.s8 %v538
          %v540 = vlaneseq
          %v541 = vshrl.u32 %v540, 7
          %v542 = vsub.s32 %v539, %v541
          %v543 = vrot.slane %v536, %v542
          %v545 = vunpack.c.l.s4 1966171168
          %v546 = vunpack.c.0.s8 %v545
          %v547 = vlaneseq
          %v548 = vshrl.u32 %v547, 7
          %v549 = vsub.s32 %v546, %v548
          %v550 = vrot.slane %v543, %v549
          %s552 = sshra.s32 %s533, 2
          %s553 = sand.u32 %s533, 3
          %s554 = sshra.s32 %s533, 2
          %s555 = sand.u32 %s533, 3
          %s556 = smul.u32 %s552, 4
          %s557 = sadd.s32 %s556, 1
          %s558 = smul.u32 %s557, 4
          %s559 = sadd.s32 %s558, %s555
          %s560 = scalar_lea.vmem [#allocation2], %s559
          %561 = vst.msk [vmem:[%s560] ss:$4 sm:$0x3] %vm508, %v550
        $region52: #{tpu_custom_call.1} parent=35 // loop_footer
          %s448 = sadd.s32 1, %s444
        $region53: #{tpu_custom_call.1} parent=35 // loop_footer_branch
          %443 = sbr.rel target = $region49
        $region54: #{tpu_custom_call.1} parent=35 // loop_exit
          _
        %v562 = vadd.s32 %v225, 128
        %vm563 = vcmp.lt.s32.totalorder %v225, 0
        %v564 = vsub.s32 0, %v225
        %v565 = vsel %vm563, %v564, %v225
        %v566 = vshrl.u32 %v565, 4
        %v567 = vand.u32 %v565, 15
        %v568 = vsub.s32 0, %v567
        %v569 = vsel %vm563, %v568, %v567
        %vm570 = vcmp.lt.s32.totalorder %v562, 0
        %v571 = vsub.s32 0, %v562
        %v572 = vsel %vm570, %v571, %v562
        %v573 = vshrl.u32 %v572, 4
        %v574 = vand.u32 %v572, 15
        %v575 = vsub.s32 0, %v574
        %v576 = vsel %vm570, %v575, %v574
        %vm577 = vcmp.ne.s32.totalorder %v569, 0
        %vm578 = vcmp.ne.s32.totalorder %v576, 0
        %vm579 = vcmp.lt.s32.totalorder %v569, 0
        %vm580 = vcmp.lt.s32.totalorder %v576, 0
        %vm581 = vmand %vm579, %vm577
        %vm582 = vmand %vm580, %vm578
        %v583 = vadd.s32 %v569, 16
        %v584 = vadd.s32 %v576, 16
        %v585 = vsel %vm581, %v583, %v569
        %v586 = vsel %vm582, %v584, %v576
        %v587 = vld [vmem:[%s3] sm:$0xf]
        %v588 = vld [vmem:[#allocation2] sm:$0xff]
        %v589 = vld [vmem:[#allocation2 + $0x8] sm:$0xf]
        %591 = vset.pattern.permute.xlu0 0
        %592 = vperm.xlu0 %591, %v587
        %v593 = vpop.permute.xlu0 %592
        %v597 = vcombine.high %v588, %v588
        %598 = vrot.lane.b32.xlu0 %v588, 51
        %v599 = vpop.permute.xlu0 %598
        %600 = vrot.lane.b32.xlu0 %v597, 51
        %v601 = vpop.permute.xlu0 %600
        %602 = vrot.lane.b32.xlu0 %v589, 51
        %v603 = vpop.permute.xlu0 %602
        %vm604 = vcmask 416768
        %v605 = vsel %vm604, %v599, %v601
        %v606 = vsel %vm604, %v601, %v603
        %v609 = vmul.f32 %v593, %v605
        %v610 = vmul.f32 %v593, %v606
        %v611 = vadd.f32 %v609, 0.0
        %v612 = vadd.f32 %v610, 0.0
        %v613 = vld [vmem:[%s3] sm:$0xf]
        %v614 = vld [vmem:[#allocation2] sm:$0xff]
        %v615 = vld [vmem:[#allocation2 + $0x8] sm:$0xf]
        %617 = vset.pattern.permute.xlu0 7
        %618 = vperm.xlu0 %617, %v613
        %v619 = vpop.permute.xlu0 %618
        %v623 = vcombine.high %v614, %v614
        %624 = vrot.lane.b32.xlu0 %v614, 35
        %v625 = vpop.permute.xlu0 %624
        %626 = vrot.lane.b32.xlu0 %v623, 35
        %v627 = vpop.permute.xlu0 %626
        %628 = vrot.lane.b32.xlu0 %v615, 35
        %v629 = vpop.permute.xlu0 %628
        %vm630 = vcmask 285696
        %v631 = vsel %vm630, %v625, %v627
        %v632 = vsel %vm630, %v627, %v629
        %v635 = vmul.f32 %v619, %v631
        %v636 = vmul.f32 %v619, %v632
        %v637 = vadd.f32 %v611, %v635
        %v638 = vadd.f32 %v612, %v636
        %v639 = vld [vmem:[%s3] sm:$0xf]
        %v640 = vld [vmem:[#allocation2] sm:$0xff]
        %v641 = vld [vmem:[#allocation2 + $0x8] sm:$0xf]
        %643 = vset.pattern.permute.xlu0 14
        %644 = vperm.xlu0 %643, %v639
        %v645 = vpop.permute.xlu0 %644
        %v649 = vcombine.high %v640, %v640
        %650 = vrot.lane.b32.xlu0 %v640, 19
        %v651 = vpop.permute.xlu0 %650
        %652 = vrot.lane.b32.xlu0 %v649, 19
        %v653 = vpop.permute.xlu0 %652
        %654 = vrot.lane.b32.xlu0 %v641, 19
        %v655 = vpop.permute.xlu0 %654
        %vm656 = vcmask 154624
        %v657 = vsel %vm656, %v651, %v653
        %v658 = vsel %vm656, %v653, %v655
        %v661 = vmul.f32 %v645, %v657
        %v662 = vmul.f32 %v645, %v658
        %v663 = vadd.f32 %v637, %v661
        %v664 = vadd.f32 %v638, %v662
        %v665 = vld [vmem:[%s3] sm:$0xf]
        %v666 = vld [vmem:[#allocation2] sm:$0xff]
        %v667 = vld [vmem:[#allocation2 + $0x8] sm:$0xf]
        %669 = vset.pattern.permute.xlu0 21
        %670 = vperm.xlu0 %669, %v665
        %v671 = vpop.permute.xlu0 %670
        %v675 = vcombine.high %v666, %v666
        %676 = vrot.lane.b32.xlu0 %v666, 3
        %v677 = vpop.permute.xlu0 %676
        %678 = vrot.lane.b32.xlu0 %v675, 3
        %v679 = vpop.permute.xlu0 %678
        %680 = vrot.lane.b32.xlu0 %v667, 3
        %v681 = vpop.permute.xlu0 %680
        %vm682 = vcmask 23552
        %v683 = vsel %vm682, %v677, %v679
        %v684 = vsel %vm682, %v679, %v681
        %v687 = vmul.f32 %v671, %v683
        %v688 = vmul.f32 %v671, %v684
        %v689 = vadd.f32 %v663, %v687
        %v690 = vadd.f32 %v664, %v688
        %v691 = vld [vmem:[%s3] sm:$0xf]
        %v692 = vld [vmem:[#allocation2 + $0x4] sm:$0xff]
        %v693 = vld [vmem:[#allocation2 + $0xc] sm:$0xf]
        %695 = vset.pattern.permute.xlu0 28
        %696 = vperm.xlu0 %695, %v691
        %v697 = vpop.permute.xlu0 %696
        %v701 = vcombine.high %v692, %v692
        %702 = vrot.lane.b32.xlu0 %v692, 115
        %v703 = vpop.permute.xlu0 %702
        %704 = vrot.lane.b32.xlu0 %v701, 115
        %v705 = vpop.permute.xlu0 %704
        %706 = vrot.lane.b32.xlu0 %v693, 115
        %v707 = vpop.permute.xlu0 %706
        %vm708 = vcmask 941056
        %v709 = vsel %vm708, %v703, %v705
        %v710 = vsel %vm708, %v705, %v707
        %v713 = vmul.f32 %v697, %v709
        %v714 = vmul.f32 %v697, %v710
        %v715 = vadd.f32 %v689, %v713
        %v716 = vadd.f32 %v690, %v714
        %v717 = vld [vmem:[%s3] sm:$0xf]
        %v718 = vld [vmem:[#allocation2 + $0x4] sm:$0xff]
        %v719 = vld [vmem:[#allocation2 + $0xc] sm:$0xf]
        %721 = vset.pattern.permute.xlu0 35
        %722 = vperm.xlu0 %721, %v717
        %v723 = vpop.permute.xlu0 %722
        %v727 = vcombine.high %v718, %v718
        %728 = vrot.lane.b32.xlu0 %v718, 99
        %v729 = vpop.permute.xlu0 %728
        %730 = vrot.lane.b32.xlu0 %v727, 99
        %v731 = vpop.permute.xlu0 %730
        %732 = vrot.lane.b32.xlu0 %v719, 99
        %v733 = vpop.permute.xlu0 %732
        %vm734 = vcmask 809984
        %v735 = vsel %vm734, %v729, %v731
        %v736 = vsel %vm734, %v731, %v733
        %v739 = vmul.f32 %v723, %v735
        %v740 = vmul.f32 %v723, %v736
        %v741 = vadd.f32 %v715, %v739
        %v742 = vadd.f32 %v716, %v740
        %v743 = vld [vmem:[%s3] sm:$0xf]
        %v744 = vld [vmem:[#allocation2 + $0x4] sm:$0xff]
        %v745 = vld [vmem:[#allocation2 + $0xc] sm:$0xf]
        %747 = vset.pattern.permute.xlu0 42
        %748 = vperm.xlu0 %747, %v743
        %v749 = vpop.permute.xlu0 %748
        %v753 = vcombine.high %v744, %v744
        %754 = vrot.lane.b32.xlu0 %v744, 83
        %v755 = vpop.permute.xlu0 %754
        %756 = vrot.lane.b32.xlu0 %v753, 83
        %v757 = vpop.permute.xlu0 %756
        %758 = vrot.lane.b32.xlu0 %v745, 83
        %v759 = vpop.permute.xlu0 %758
        %vm760 = vcmask 678912
        %v761 = vsel %vm760, %v755, %v757
        %v762 = vsel %vm760, %v757, %v759
        %v765 = vmul.f32 %v749, %v761
        %v766 = vmul.f32 %v749, %v762
        %v767 = vadd.f32 %v741, %v765
        %v768 = vadd.f32 %v742, %v766
        %vm769 = vcmp.ge.s32.totalorder %v585, 3
        %vm770 = vcmp.ge.s32.totalorder %v586, 3
        %vm771 = vcmp.lt.s32.totalorder %v585, 19
        %vm772 = vcmp.lt.s32.totalorder %v586, 19
        %vm773 = vmand %vm769, %vm771
        %vm774 = vmand %vm770, %vm772
        %v775 = vsel %vm773, 1, 0
        %v776 = vsel %vm774, 1, 0
        %vm777 = vcmp.eq.s32.totalorder %v775, 1
        %vm778 = vcmp.eq.s32.totalorder %v776, 1
        %v779 = vsel %vm777, %v767, 0.0
        %v780 = vsel %vm778, %v768, 0.0
        %v781 = vadd.f32 %v779, 0.0
        %v782 = vadd.f32 %v780, 0.0
        %v783 = vld [vmem:[%s3] sm:$0xf]
        %v784 = vld [vmem:[#allocation2] sm:$0xff]
        %v785 = vld [vmem:[#allocation2 + $0x8] sm:$0xf]
        %787 = vset.pattern.permute.xlu0 1
        %788 = vperm.xlu0 %787, %v783
        %v789 = vpop.permute.xlu0 %788
        %v793 = vcombine.high %v784, %v784
        %794 = vrot.lane.b32.xlu0 %v784, 50
        %v795 = vpop.permute.xlu0 %794
        %796 = vrot.lane.b32.xlu0 %v793, 50
        %v797 = vpop.permute.xlu0 %796
        %798 = vrot.lane.b32.xlu0 %v785, 50
        %v799 = vpop.permute.xlu0 %798
        %vm800 = vcmask 408576
        %v801 = vsel %vm800, %v795, %v797
        %v802 = vsel %vm800, %v797, %v799
        %v805 = vmul.f32 %v789, %v801
        %v806 = vmul.f32 %v789, %v802
        %v807 = vadd.f32 %v805, 0.0
        %v808 = vadd.f32 %v806, 0.0
        %v809 = vld [vmem:[%s3] sm:$0xf]
        %v810 = vld [vmem:[#allocation2] sm:$0xff]
        %v811 = vld [vmem:[#allocation2 + $0x8] sm:$0xf]
        %813 = vset.pattern.permute.xlu0 8
        %814 = vperm.xlu0 %813, %v809
        %v815 = vpop.permute.xlu0 %814
        %v819 = vcombine.high %v810, %v810
        %820 = vrot.lane.b32.xlu0 %v810, 34
        %v821 = vpop.permute.xlu0 %820
        %822 = vrot.lane.b32.xlu0 %v819, 34
        %v823 = vpop.permute.xlu0 %822
        %824 = vrot.lane.b32.xlu0 %v811, 34
        %v825 = vpop.permute.xlu0 %824
        %vm826 = vcmask 277504
        %v827 = vsel %vm826, %v821, %v823
        %v828 = vsel %vm826, %v823, %v825
        %v831 = vmul.f32 %v815, %v827
        %v832 = vmul.f32 %v815, %v828
        %v833 = vadd.f32 %v807, %v831
        %v834 = vadd.f32 %v808, %v832
        %v835 = vld [vmem:[%s3] sm:$0xf]
        %v836 = vld [vmem:[#allocation2] sm:$0xff]
        %v837 = vld [vmem:[#allocation2 + $0x8] sm:$0xf]
        %839 = vset.pattern.permute.xlu0 15
        %840 = vperm.xlu0 %839, %v835
        %v841 = vpop.permute.xlu0 %840
        %v845 = vcombine.high %v836, %v836
        %846 = vrot.lane.b32.xlu0 %v836, 18
        %v847 = vpop.permute.xlu0 %846
        %848 = vrot.lane.b32.xlu0 %v845, 18
        %v849 = vpop.permute.xlu0 %848
        %850 = vrot.lane.b32.xlu0 %v837, 18
        %v851 = vpop.permute.xlu0 %850
        %vm852 = vcmask 146432
        %v853 = vsel %vm852, %v847, %v849
        %v854 = vsel %vm852, %v849, %v851
        %v857 = vmul.f32 %v841, %v853
        %v858 = vmul.f32 %v841, %v854
        %v859 = vadd.f32 %v833, %v857
        %v860 = vadd.f32 %v834, %v858
        %v861 = vld [vmem:[%s3] sm:$0xf]
        %v862 = vld [vmem:[#allocation2] sm:$0xff]
        %v863 = vld [vmem:[#allocation2 + $0x8] sm:$0xf]
        %865 = vset.pattern.permute.xlu0 22
        %866 = vperm.xlu0 %865, %v861
        %v867 = vpop.permute.xlu0 %866
        %v871 = vcombine.high %v862, %v862
        %872 = vrot.lane.b32.xlu0 %v862, 2
        %v873 = vpop.permute.xlu0 %872
        %874 = vrot.lane.b32.xlu0 %v871, 2
        %v875 = vpop.permute.xlu0 %874
        %876 = vrot.lane.b32.xlu0 %v863, 2
        %v877 = vpop.permute.xlu0 %876
        %v878 = vsel %vm345, %v873, %v875
        %v879 = vsel %vm345, %v875, %v877
        %v882 = vmul.f32 %v867, %v878
        %v883 = vmul.f32 %v867, %v879
        %v884 = vadd.f32 %v859, %v882
        %v885 = vadd.f32 %v860, %v883
        %v886 = vld [vmem:[%s3] sm:$0xf]
        %v887 = vld [vmem:[#allocation2 + $0x4] sm:$0xff]
        %v888 = vld [vmem:[#allocation2 + $0xc] sm:$0xf]
        %890 = vset.pattern.permute.xlu0 29
        %891 = vperm.xlu0 %890, %v886
        %v892 = vpop.permute.xlu0 %891
        %v896 = vcombine.high %v887, %v887
        %897 = vrot.lane.b32.xlu0 %v887, 114
        %v898 = vpop.permute.xlu0 %897
        %899 = vrot.lane.b32.xlu0 %v896, 114
        %v900 = vpop.permute.xlu0 %899
        %901 = vrot.lane.b32.xlu0 %v888, 114
        %v902 = vpop.permute.xlu0 %901
        %vm903 = vcmask 932864
        %v904 = vsel %vm903, %v898, %v900
        %v905 = vsel %vm903, %v900, %v902
        %v908 = vmul.f32 %v892, %v904
        %v909 = vmul.f32 %v892, %v905
        %v910 = vadd.f32 %v884, %v908
        %v911 = vadd.f32 %v885, %v909
        %v912 = vld [vmem:[%s3] sm:$0xf]
        %v913 = vld [vmem:[#allocation2 + $0x4] sm:$0xff]
        %v914 = vld [vmem:[#allocation2 + $0xc] sm:$0xf]
        %916 = vset.pattern.permute.xlu0 36
        %917 = vperm.xlu0 %916, %v912
        %v918 = vpop.permute.xlu0 %917
        %v922 = vcombine.high %v913, %v913
        %923 = vrot.lane.b32.xlu0 %v913, 98
        %v924 = vpop.permute.xlu0 %923
        %925 = vrot.lane.b32.xlu0 %v922, 98
        %v926 = vpop.permute.xlu0 %925
        %927 = vrot.lane.b32.xlu0 %v914, 98
        %v928 = vpop.permute.xlu0 %927
        %vm929 = vcmask 801792
        %v930 = vsel %vm929, %v924, %v926
        %v931 = vsel %vm929, %v926, %v928
        %v934 = vmul.f32 %v918, %v930
        %v935 = vmul.f32 %v918, %v931
        %v936 = vadd.f32 %v910, %v934
        %v937 = vadd.f32 %v911, %v935
        %v938 = vld [vmem:[%s3] sm:$0xf]
        %v939 = vld [vmem:[#allocation2 + $0x4] sm:$0xff]
        %v940 = vld [vmem:[#allocation2 + $0xc] sm:$0xf]
        %942 = vset.pattern.permute.xlu0 43
        %943 = vperm.xlu0 %942, %v938
        %v944 = vpop.permute.xlu0 %943
        %v948 = vcombine.high %v939, %v939
        %949 = vrot.lane.b32.xlu0 %v939, 82
        %v950 = vpop.permute.xlu0 %949
        %951 = vrot.lane.b32.xlu0 %v948, 82
        %v952 = vpop.permute.xlu0 %951
        %953 = vrot.lane.b32.xlu0 %v940, 82
        %v954 = vpop.permute.xlu0 %953
        %vm955 = vcmask 670720
        %v956 = vsel %vm955, %v950, %v952
        %v957 = vsel %vm955, %v952, %v954
        %v960 = vmul.f32 %v944, %v956
        %v961 = vmul.f32 %v944, %v957
        %v962 = vadd.f32 %v936, %v960
        %v963 = vadd.f32 %v937, %v961
        %vm964 = vcmp.ge.s32.totalorder %v585, 2
        %vm965 = vcmp.ge.s32.totalorder %v586, 2
        %vm966 = vcmp.lt.s32.totalorder %v585, 18
        %vm967 = vcmp.lt.s32.totalorder %v586, 18
        %vm968 = vmand %vm964, %vm966
        %vm969 = vmand %vm965, %vm967
        %v970 = vsel %vm968, 1, 0
        %v971 = vsel %vm969, 1, 0
        %vm972 = vcmp.eq.s32.totalorder %v970, 1
        %vm973 = vcmp.eq.s32.totalorder %v971, 1
        %v974 = vsel %vm972, %v962, 0.0
        %v975 = vsel %vm973, %v963, 0.0
        %v976 = vadd.f32 %v781, %v974
        %v977 = vadd.f32 %v782, %v975
        %v978 = vld [vmem:[%s3] sm:$0xf]
        %v979 = vld [vmem:[#allocation2] sm:$0xff]
        %v980 = vld [vmem:[#allocation2 + $0x8] sm:$0xf]
        %982 = vset.pattern.permute.xlu0 2
        %983 = vperm.xlu0 %982, %v978
        %v984 = vpop.permute.xlu0 %983
        %v988 = vcombine.high %v979, %v979
        %989 = vrot.lane.b32.xlu0 %v979, 49
        %v990 = vpop.permute.xlu0 %989
        %991 = vrot.lane.b32.xlu0 %v988, 49
        %v992 = vpop.permute.xlu0 %991
        %993 = vrot.lane.b32.xlu0 %v980, 49
        %v994 = vpop.permute.xlu0 %993
        %vm995 = vcmask 400384
        %v996 = vsel %vm995, %v990, %v992
        %v997 = vsel %vm995, %v992, %v994
        %v1000 = vmul.f32 %v984, %v996
        %v1001 = vmul.f32 %v984, %v997
        %v1002 = vadd.f32 %v1000, 0.0
        %v1003 = vadd.f32 %v1001, 0.0
        %v1004 = vld [vmem:[%s3] sm:$0xf]
        %v1005 = vld [vmem:[#allocation2] sm:$0xff]
        %v1006 = vld [vmem:[#allocation2 + $0x8] sm:$0xf]
        %1008 = vset.pattern.permute.xlu0 9
        %1009 = vperm.xlu0 %1008, %v1004
        %v1010 = vpop.permute.xlu0 %1009
        %v1014 = vcombine.high %v1005, %v1005
        %1015 = vrot.lane.b32.xlu0 %v1005, 33
        %v1016 = vpop.permute.xlu0 %1015
        %1017 = vrot.lane.b32.xlu0 %v1014, 33
        %v1018 = vpop.permute.xlu0 %1017
        %1019 = vrot.lane.b32.xlu0 %v1006, 33
        %v1020 = vpop.permute.xlu0 %1019
        %vm1021 = vcmask 269312
        %v1022 = vsel %vm1021, %v1016, %v1018
        %v1023 = vsel %vm1021, %v1018, %v1020
        %v1026 = vmul.f32 %v1010, %v1022
        %v1027 = vmul.f32 %v1010, %v1023
        %v1028 = vadd.f32 %v1002, %v1026
        %v1029 = vadd.f32 %v1003, %v1027
        %v1030 = vld [vmem:[%s3] sm:$0xf]
        %v1031 = vld [vmem:[#allocation2] sm:$0xff]
        %v1032 = vld [vmem:[#allocation2 + $0x8] sm:$0xf]
        %1034 = vset.pattern.permute.xlu0 16
        %1035 = vperm.xlu0 %1034, %v1030
        %v1036 = vpop.permute.xlu0 %1035
        %v1040 = vcombine.high %v1031, %v1031
        %1041 = vrot.lane.b32.xlu0 %v1031, 17
        %v1042 = vpop.permute.xlu0 %1041
        %1043 = vrot.lane.b32.xlu0 %v1040, 17
        %v1044 = vpop.permute.xlu0 %1043
        %1045 = vrot.lane.b32.xlu0 %v1032, 17
        %v1046 = vpop.permute.xlu0 %1045
        %vm1047 = vcmask 138240
        %v1048 = vsel %vm1047, %v1042, %v1044
        %v1049 = vsel %vm1047, %v1044, %v1046
        %v1052 = vmul.f32 %v1036, %v1048
        %v1053 = vmul.f32 %v1036, %v1049
        %v1054 = vadd.f32 %v1028, %v1052
        %v1055 = vadd.f32 %v1029, %v1053
        %v1056 = vld [vmem:[%s3] sm:$0xf]
        %v1057 = vld [vmem:[#allocation2] sm:$0xff]
        %v1058 = vld [vmem:[#allocation2 + $0x8] sm:$0xf]
        %1060 = vset.pattern.permute.xlu0 23
        %1061 = vperm.xlu0 %1060, %v1056
        %v1062 = vpop.permute.xlu0 %1061
        %v1066 = vcombine.high %v1057, %v1057
        %1067 = vrot.lane.b32.xlu0 %v1057, 1
        %v1068 = vpop.permute.xlu0 %1067
        %1069 = vrot.lane.b32.xlu0 %v1066, 1
        %v1070 = vpop.permute.xlu0 %1069
        %1071 = vrot.lane.b32.xlu0 %v1058, 1
        %v1072 = vpop.permute.xlu0 %1071
        %vm1073 = vcmask 7168
        %v1074 = vsel %vm1073, %v1068, %v1070
        %v1075 = vsel %vm1073, %v1070, %v1072
        %v1078 = vmul.f32 %v1062, %v1074
        %v1079 = vmul.f32 %v1062, %v1075
        %v1080 = vadd.f32 %v1054, %v1078
        %v1081 = vadd.f32 %v1055, %v1079
        %v1082 = vld [vmem:[%s3] sm:$0xf]
        %v1083 = vld [vmem:[#allocation2 + $0x4] sm:$0xff]
        %v1084 = vld [vmem:[#allocation2 + $0xc] sm:$0xf]
        %1086 = vset.pattern.permute.xlu0 30
        %1087 = vperm.xlu0 %1086, %v1082
        %v1088 = vpop.permute.xlu0 %1087
        %v1092 = vcombine.high %v1083, %v1083
        %1093 = vrot.lane.b32.xlu0 %v1083, 113
        %v1094 = vpop.permute.xlu0 %1093
        %1095 = vrot.lane.b32.xlu0 %v1092, 113
        %v1096 = vpop.permute.xlu0 %1095
        %1097 = vrot.lane.b32.xlu0 %v1084, 113
        %v1098 = vpop.permute.xlu0 %1097
        %vm1099 = vcmask 924672
        %v1100 = vsel %vm1099, %v1094, %v1096
        %v1101 = vsel %vm1099, %v1096, %v1098
        %v1104 = vmul.f32 %v1088, %v1100
        %v1105 = vmul.f32 %v1088, %v1101
        %v1106 = vadd.f32 %v1080, %v1104
        %v1107 = vadd.f32 %v1081, %v1105
        %v1108 = vld [vmem:[%s3] sm:$0xf]
        %v1109 = vld [vmem:[#allocation2 + $0x4] sm:$0xff]
        %v1110 = vld [vmem:[#allocation2 + $0xc] sm:$0xf]
        %1112 = vset.pattern.permute.xlu0 37
        %1113 = vperm.xlu0 %1112, %v1108
        %v1114 = vpop.permute.xlu0 %1113
        %v1118 = vcombine.high %v1109, %v1109
        %1119 = vrot.lane.b32.xlu0 %v1109, 97
        %v1120 = vpop.permute.xlu0 %1119
        %1121 = vrot.lane.b32.xlu0 %v1118, 97
        %v1122 = vpop.permute.xlu0 %1121
        %1123 = vrot.lane.b32.xlu0 %v1110, 97
        %v1124 = vpop.permute.xlu0 %1123
        %vm1125 = vcmask 793600
        %v1126 = vsel %vm1125, %v1120, %v1122
        %v1127 = vsel %vm1125, %v1122, %v1124
        %v1130 = vmul.f32 %v1114, %v1126
        %v1131 = vmul.f32 %v1114, %v1127
        %v1132 = vadd.f32 %v1106, %v1130
        %v1133 = vadd.f32 %v1107, %v1131
        %v1134 = vld [vmem:[%s3] sm:$0xf]
        %v1135 = vld [vmem:[#allocation2 + $0x4] sm:$0xff]
        %v1136 = vld [vmem:[#allocation2 + $0xc] sm:$0xf]
        %1138 = vset.pattern.permute.xlu0 44
        %1139 = vperm.xlu0 %1138, %v1134
        %v1140 = vpop.permute.xlu0 %1139
        %v1144 = vcombine.high %v1135, %v1135
        %1145 = vrot.lane.b32.xlu0 %v1135, 81
        %v1146 = vpop.permute.xlu0 %1145
        %1147 = vrot.lane.b32.xlu0 %v1144, 81
        %v1148 = vpop.permute.xlu0 %1147
        %1149 = vrot.lane.b32.xlu0 %v1136, 81
        %v1150 = vpop.permute.xlu0 %1149
        %vm1151 = vcmask 662528
        %v1152 = vsel %vm1151, %v1146, %v1148
        %v1153 = vsel %vm1151, %v1148, %v1150
        %v1156 = vmul.f32 %v1140, %v1152
        %v1157 = vmul.f32 %v1140, %v1153
        %v1158 = vadd.f32 %v1132, %v1156
        %v1159 = vadd.f32 %v1133, %v1157
        %vm1160 = vcmp.ge.s32.totalorder %v585, 1
        %vm1161 = vcmp.ge.s32.totalorder %v586, 1
        %vm1162 = vcmp.lt.s32.totalorder %v585, 17
        %vm1163 = vcmp.lt.s32.totalorder %v586, 17
        %vm1164 = vmand %vm1160, %vm1162
        %vm1165 = vmand %vm1161, %vm1163
        %v1166 = vsel %vm1164, 1, 0
        %v1167 = vsel %vm1165, 1, 0
        %vm1168 = vcmp.eq.s32.totalorder %v1166, 1
        %vm1169 = vcmp.eq.s32.totalorder %v1167, 1
        %v1170 = vsel %vm1168, %v1158, 0.0
        %v1171 = vsel %vm1169, %v1159, 0.0
        %v1172 = vadd.f32 %v976, %v1170
        %v1173 = vadd.f32 %v977, %v1171
        %v1174 = vld [vmem:[%s3] sm:$0xf]
        %v1175 = vld [vmem:[#allocation2] sm:$0xff]
        %v1176 = vld [vmem:[#allocation2 + $0x8] sm:$0xf]
        %1178 = vset.pattern.permute.xlu0 3
        %1179 = vperm.xlu0 %1178, %v1174
        %v1180 = vpop.permute.xlu0 %1179
        %v1184 = vcombine.high %v1175, %v1175
        %1185 = vrot.lane.b32.xlu0 %v1175, 48
        %v1186 = vpop.permute.xlu0 %1185
        %1187 = vrot.lane.b32.xlu0 %v1184, 48
        %v1188 = vpop.permute.xlu0 %1187
        %1189 = vrot.lane.b32.xlu0 %v1176, 48
        %v1190 = vpop.permute.xlu0 %1189
        %vm1191 = vcmask 392192
        %v1192 = vsel %vm1191, %v1186, %v1188
        %v1193 = vsel %vm1191, %v1188, %v1190
        %v1196 = vmul.f32 %v1180, %v1192
        %v1197 = vmul.f32 %v1180, %v1193
        %v1198 = vadd.f32 %v1196, 0.0
        %v1199 = vadd.f32 %v1197, 0.0
        %v1200 = vld [vmem:[%s3] sm:$0xf]
        %v1201 = vld [vmem:[#allocation2] sm:$0xff]
        %v1202 = vld [vmem:[#allocation2 + $0x8] sm:$0xf]
        %1204 = vset.pattern.permute.xlu0 10
        %1205 = vperm.xlu0 %1204, %v1200
        %v1206 = vpop.permute.xlu0 %1205
        %v1210 = vcombine.high %v1201, %v1201
        %1211 = vrot.lane.b32.xlu0 %v1201, 32
        %v1212 = vpop.permute.xlu0 %1211
        %1213 = vrot.lane.b32.xlu0 %v1210, 32
        %v1214 = vpop.permute.xlu0 %1213
        %1215 = vrot.lane.b32.xlu0 %v1202, 32
        %v1216 = vpop.permute.xlu0 %1215
        %vm1217 = vcmask 261120
        %v1218 = vsel %vm1217, %v1212, %v1214
        %v1219 = vsel %vm1217, %v1214, %v1216
        %v1222 = vmul.f32 %v1206, %v1218
        %v1223 = vmul.f32 %v1206, %v1219
        %v1224 = vadd.f32 %v1198, %v1222
        %v1225 = vadd.f32 %v1199, %v1223
        %v1226 = vld [vmem:[%s3] sm:$0xf]
        %v1227 = vld [vmem:[#allocation2] sm:$0xff]
        %v1228 = vld [vmem:[#allocation2 + $0x8] sm:$0xf]
        %1230 = vset.pattern.permute.xlu0 17
        %1231 = vperm.xlu0 %1230, %v1226
        %v1232 = vpop.permute.xlu0 %1231
        %v1236 = vcombine.high %v1227, %v1227
        %1237 = vrot.lane.b32.xlu0 %v1227, 16
        %v1238 = vpop.permute.xlu0 %1237
        %1239 = vrot.lane.b32.xlu0 %v1236, 16
        %v1240 = vpop.permute.xlu0 %1239
        %1241 = vrot.lane.b32.xlu0 %v1228, 16
        %v1242 = vpop.permute.xlu0 %1241
        %v1243 = vsel %vm265, %v1238, %v1240
        %v1244 = vsel %vm265, %v1240, %v1242
        %v1247 = vmul.f32 %v1232, %v1243
        %v1248 = vmul.f32 %v1232, %v1244
        %v1249 = vadd.f32 %v1224, %v1247
        %v1250 = vadd.f32 %v1225, %v1248
        %v1251 = vld [vmem:[%s3] sm:$0xf]
        %v1252 = vld [vmem:[#allocation2 + $0x4] sm:$0xff]
        %1254 = vset.pattern.permute.xlu0 24
        %1255 = vperm.xlu0 %1254, %v1251
        %v1256 = vpop.permute.xlu0 %1255
        %v1259 = vcombine.high %v1252, %v1252
        %v1261 = vmul.f32 %v1256, %v1252
        %v1262 = vmul.f32 %v1256, %v1259
        %v1263 = vadd.f32 %v1249, %v1261
        %v1264 = vadd.f32 %v1250, %v1262
        %v1265 = vld [vmem:[%s3] sm:$0xf]
        %v1266 = vld [vmem:[#allocation2 + $0x4] sm:$0xff]
        %v1267 = vld [vmem:[#allocation2 + $0xc] sm:$0xf]
        %1269 = vset.pattern.permute.xlu0 31
        %1270 = vperm.xlu0 %1269, %v1265
        %v1271 = vpop.permute.xlu0 %1270
        %v1275 = vcombine.high %v1266, %v1266
        %1276 = vrot.lane.b32.xlu0 %v1266, 112
        %v1277 = vpop.permute.xlu0 %1276
        %1278 = vrot.lane.b32.xlu0 %v1275, 112
        %v1279 = vpop.permute.xlu0 %1278
        %1280 = vrot.lane.b32.xlu0 %v1267, 112
        %v1281 = vpop.permute.xlu0 %1280
        %vm1282 = vcmask 916480
        %v1283 = vsel %vm1282, %v1277, %v1279
        %v1284 = vsel %vm1282, %v1279, %v1281
        %v1287 = vmul.f32 %v1271, %v1283
        %v1288 = vmul.f32 %v1271, %v1284
        %v1289 = vadd.f32 %v1263, %v1287
        %v1290 = vadd.f32 %v1264, %v1288
        %v1291 = vld [vmem:[%s3] sm:$0xf]
        %v1292 = vld [vmem:[#allocation2 + $0x4] sm:$0xff]
        %v1293 = vld [vmem:[#allocation2 + $0xc] sm:$0xf]
        %1295 = vset.pattern.permute.xlu0 38
        %1296 = vperm.xlu0 %1295, %v1291
        %v1297 = vpop.permute.xlu0 %1296
        %v1301 = vcombine.high %v1292, %v1292
        %1302 = vrot.lane.b32.xlu0 %v1292, 96
        %v1303 = vpop.permute.xlu0 %1302
        %1304 = vrot.lane.b32.xlu0 %v1301, 96
        %v1305 = vpop.permute.xlu0 %1304
        %1306 = vrot.lane.b32.xlu0 %v1293, 96
        %v1307 = vpop.permute.xlu0 %1306
        %vm1308 = vcmask 785408
        %v1309 = vsel %vm1308, %v1303, %v1305
        %v1310 = vsel %vm1308, %v1305, %v1307
        %v1313 = vmul.f32 %v1297, %v1309
        %v1314 = vmul.f32 %v1297, %v1310
        %v1315 = vadd.f32 %v1289, %v1313
        %v1316 = vadd.f32 %v1290, %v1314
        %v1317 = vld [vmem:[%s3] sm:$0xf]
        %v1318 = vld [vmem:[#allocation2 + $0x4] sm:$0xff]
        %v1319 = vld [vmem:[#allocation2 + $0xc] sm:$0xf]
        %1321 = vset.pattern.permute.xlu0 45
        %1322 = vperm.xlu0 %1321, %v1317
        %v1323 = vpop.permute.xlu0 %1322
        %v1327 = vcombine.high %v1318, %v1318
        %1328 = vrot.lane.b32.xlu0 %v1318, 80
        %v1329 = vpop.permute.xlu0 %1328
        %1330 = vrot.lane.b32.xlu0 %v1327, 80
        %v1331 = vpop.permute.xlu0 %1330
        %1332 = vrot.lane.b32.xlu0 %v1319, 80
        %v1333 = vpop.permute.xlu0 %1332
        %vm1334 = vcmask 654336
        %v1335 = vsel %vm1334, %v1329, %v1331
        %v1336 = vsel %vm1334, %v1331, %v1333
        %v1339 = vmul.f32 %v1323, %v1335
        %v1340 = vmul.f32 %v1323, %v1336
        %v1341 = vadd.f32 %v1315, %v1339
        %v1342 = vadd.f32 %v1316, %v1340
        %v1343 = vadd.f32 %v1172, %v1341
        %v1344 = vadd.f32 %v1173, %v1342
        %v1345 = vld [vmem:[%s3] sm:$0xf]
        %v1346 = vld [vmem:[#allocation2] sm:$0xff]
        %v1347 = vld [vmem:[#allocation2 + $0x8] sm:$0xf]
        %1349 = vset.pattern.permute.xlu0 4
        %1350 = vperm.xlu0 %1349, %v1345
        %v1351 = vpop.permute.xlu0 %1350
        %v1355 = vcombine.high %v1346, %v1346
        %1356 = vrot.lane.b32.xlu0 %v1346, 47
        %v1357 = vpop.permute.xlu0 %1356
        %1358 = vrot.lane.b32.xlu0 %v1355, 47
        %v1359 = vpop.permute.xlu0 %1358
        %1360 = vrot.lane.b32.xlu0 %v1347, 47
        %v1361 = vpop.permute.xlu0 %1360
        %vm1362 = vcmask 384000
        %v1363 = vsel %vm1362, %v1357, %v1359
        %v1364 = vsel %vm1362, %v1359, %v1361
        %v1367 = vmul.f32 %v1351, %v1363
        %v1368 = vmul.f32 %v1351, %v1364
        %v1369 = vadd.f32 %v1367, 0.0
        %v1370 = vadd.f32 %v1368, 0.0
        %v1371 = vld [vmem:[%s3] sm:$0xf]
        %v1372 = vld [vmem:[#allocation2] sm:$0xff]
        %v1373 = vld [vmem:[#allocation2 + $0x8] sm:$0xf]
        %1375 = vset.pattern.permute.xlu0 11
        %1376 = vperm.xlu0 %1375, %v1371
        %v1377 = vpop.permute.xlu0 %1376
        %v1381 = vcombine.high %v1372, %v1372
        %1382 = vrot.lane.b32.xlu0 %v1372, 31
        %v1383 = vpop.permute.xlu0 %1382
        %1384 = vrot.lane.b32.xlu0 %v1381, 31
        %v1385 = vpop.permute.xlu0 %1384
        %1386 = vrot.lane.b32.xlu0 %v1373, 31
        %v1387 = vpop.permute.xlu0 %1386
        %vm1388 = vcmask 252928
        %v1389 = vsel %vm1388, %v1383, %v1385
        %v1390 = vsel %vm1388, %v1385, %v1387
        %v1393 = vmul.f32 %v1377, %v1389
        %v1394 = vmul.f32 %v1377, %v1390
        %v1395 = vadd.f32 %v1369, %v1393
        %v1396 = vadd.f32 %v1370, %v1394
        %v1397 = vld [vmem:[%s3] sm:$0xf]
        %v1398 = vld [vmem:[#allocation2] sm:$0xff]
        %v1399 = vld [vmem:[#allocation2 + $0x8] sm:$0xf]
        %1401 = vset.pattern.permute.xlu0 18
        %1402 = vperm.xlu0 %1401, %v1397
        %v1403 = vpop.permute.xlu0 %1402
        %v1407 = vcombine.high %v1398, %v1398
        %1408 = vrot.lane.b32.xlu0 %v1398, 15
        %v1409 = vpop.permute.xlu0 %1408
        %1410 = vrot.lane.b32.xlu0 %v1407, 15
        %v1411 = vpop.permute.xlu0 %1410
        %1412 = vrot.lane.b32.xlu0 %v1399, 15
        %v1413 = vpop.permute.xlu0 %1412
        %vm1414 = vcmask 121856
        %v1415 = vsel %vm1414, %v1409, %v1411
        %v1416 = vsel %vm1414, %v1411, %v1413
        %v1419 = vmul.f32 %v1403, %v1415
        %v1420 = vmul.f32 %v1403, %v1416
        %v1421 = vadd.f32 %v1395, %v1419
        %v1422 = vadd.f32 %v1396, %v1420
        %v1423 = vld [vmem:[%s3] sm:$0xf]
        %v1424 = vld [vmem:[#allocation2 + $0x4] sm:$0xff]
        %v1425 = vld [vmem:[#allocation2 + $0xc] sm:$0xf]
        %1427 = vset.pattern.permute.xlu0 25
        %1428 = vperm.xlu0 %1427, %v1423
        %v1429 = vpop.permute.xlu0 %1428
        %v1433 = vcombine.high %v1424, %v1424
        %1434 = vrot.lane.b32.xlu0 %v1424, 127
        %v1435 = vpop.permute.xlu0 %1434
        %1436 = vrot.lane.b32.xlu0 %v1433, 127
        %v1437 = vpop.permute.xlu0 %1436
        %1438 = vrot.lane.b32.xlu0 %v1425, 127
        %v1439 = vpop.permute.xlu0 %1438
        %vm1440 = vcmask 1039360
        %v1441 = vsel %vm1440, %v1435, %v1437
        %v1442 = vsel %vm1440, %v1437, %v1439
        %v1445 = vmul.f32 %v1429, %v1441
        %v1446 = vmul.f32 %v1429, %v1442
        %v1447 = vadd.f32 %v1421, %v1445
        %v1448 = vadd.f32 %v1422, %v1446
        %v1449 = vld [vmem:[%s3] sm:$0xf]
        %v1450 = vld [vmem:[#allocation2 + $0x4] sm:$0xff]
        %v1451 = vld [vmem:[#allocation2 + $0xc] sm:$0xf]
        %1453 = vset.pattern.permute.xlu0 32
        %1454 = vperm.xlu0 %1453, %v1449
        %v1455 = vpop.permute.xlu0 %1454
        %v1459 = vcombine.high %v1450, %v1450
        %1460 = vrot.lane.b32.xlu0 %v1450, 111
        %v1461 = vpop.permute.xlu0 %1460
        %1462 = vrot.lane.b32.xlu0 %v1459, 111
        %v1463 = vpop.permute.xlu0 %1462
        %1464 = vrot.lane.b32.xlu0 %v1451, 111
        %v1465 = vpop.permute.xlu0 %1464
        %vm1466 = vcmask 908288
        %v1467 = vsel %vm1466, %v1461, %v1463
        %v1468 = vsel %vm1466, %v1463, %v1465
        %v1471 = vmul.f32 %v1455, %v1467
        %v1472 = vmul.f32 %v1455, %v1468
        %v1473 = vadd.f32 %v1447, %v1471
        %v1474 = vadd.f32 %v1448, %v1472
        %v1475 = vld [vmem:[%s3] sm:$0xf]
        %v1476 = vld [vmem:[#allocation2 + $0x4] sm:$0xff]
        %v1477 = vld [vmem:[#allocation2 + $0xc] sm:$0xf]
        %1479 = vset.pattern.permute.xlu0 39
        %1480 = vperm.xlu0 %1479, %v1475
        %v1481 = vpop.permute.xlu0 %1480
        %v1485 = vcombine.high %v1476, %v1476
        %1486 = vrot.lane.b32.xlu0 %v1476, 95
        %v1487 = vpop.permute.xlu0 %1486
        %1488 = vrot.lane.b32.xlu0 %v1485, 95
        %v1489 = vpop.permute.xlu0 %1488
        %1490 = vrot.lane.b32.xlu0 %v1477, 95
        %v1491 = vpop.permute.xlu0 %1490
        %vm1492 = vcmask 777216
        %v1493 = vsel %vm1492, %v1487, %v1489
        %v1494 = vsel %vm1492, %v1489, %v1491
        %v1497 = vmul.f32 %v1481, %v1493
        %v1498 = vmul.f32 %v1481, %v1494
        %v1499 = vadd.f32 %v1473, %v1497
        %v1500 = vadd.f32 %v1474, %v1498
        %v1501 = vld [vmem:[%s3] sm:$0xf]
        %v1502 = vld [vmem:[#allocation2 + $0x4] sm:$0xff]
        %v1503 = vld [vmem:[#allocation2 + $0xc] sm:$0xf]
        %1505 = vset.pattern.permute.xlu0 46
        %1506 = vperm.xlu0 %1505, %v1501
        %v1507 = vpop.permute.xlu0 %1506
        %v1511 = vcombine.high %v1502, %v1502
        %1512 = vrot.lane.b32.xlu0 %v1502, 79
        %v1513 = vpop.permute.xlu0 %1512
        %1514 = vrot.lane.b32.xlu0 %v1511, 79
        %v1515 = vpop.permute.xlu0 %1514
        %1516 = vrot.lane.b32.xlu0 %v1503, 79
        %v1517 = vpop.permute.xlu0 %1516
        %vm1518 = vcmask 646144
        %v1519 = vsel %vm1518, %v1513, %v1515
        %v1520 = vsel %vm1518, %v1515, %v1517
        %v1523 = vmul.f32 %v1507, %v1519
        %v1524 = vmul.f32 %v1507, %v1520
        %v1525 = vadd.f32 %v1499, %v1523
        %v1526 = vadd.f32 %v1500, %v1524
        %vm1527 = vcmp.ge.s32.totalorder %v585, 4294967295
        %vm1528 = vcmp.ge.s32.totalorder %v586, 4294967295
        %vm1529 = vcmp.lt.s32.totalorder %v585, 15
        %vm1530 = vcmp.lt.s32.totalorder %v586, 15
        %vm1531 = vmand %vm1527, %vm1529
        %vm1532 = vmand %vm1528, %vm1530
        %v1533 = vsel %vm1531, 1, 0
        %v1534 = vsel %vm1532, 1, 0
        %vm1535 = vcmp.eq.s32.totalorder %v1533, 1
        %vm1536 = vcmp.eq.s32.totalorder %v1534, 1
        %v1537 = vsel %vm1535, %v1525, 0.0
        %v1538 = vsel %vm1536, %v1526, 0.0
        %v1539 = vadd.f32 %v1343, %v1537
        %v1540 = vadd.f32 %v1344, %v1538
        %v1541 = vld [vmem:[%s3] sm:$0xf]
        %v1542 = vld [vmem:[#allocation2] sm:$0xff]
        %v1543 = vld [vmem:[#allocation2 + $0x8] sm:$0xf]
        %1545 = vset.pattern.permute.xlu0 5
        %1546 = vperm.xlu0 %1545, %v1541
        %v1547 = vpop.permute.xlu0 %1546
        %v1551 = vcombine.high %v1542, %v1542
        %1552 = vrot.lane.b32.xlu0 %v1542, 46
        %v1553 = vpop.permute.xlu0 %1552
        %1554 = vrot.lane.b32.xlu0 %v1551, 46
        %v1555 = vpop.permute.xlu0 %1554
        %1556 = vrot.lane.b32.xlu0 %v1543, 46
        %v1557 = vpop.permute.xlu0 %1556
        %vm1558 = vcmask 375808
        %v1559 = vsel %vm1558, %v1553, %v1555
        %v1560 = vsel %vm1558, %v1555, %v1557
        %v1563 = vmul.f32 %v1547, %v1559
        %v1564 = vmul.f32 %v1547, %v1560
        %v1565 = vadd.f32 %v1563, 0.0
        %v1566 = vadd.f32 %v1564, 0.0
        %v1567 = vld [vmem:[%s3] sm:$0xf]
        %v1568 = vld [vmem:[#allocation2] sm:$0xff]
        %v1569 = vld [vmem:[#allocation2 + $0x8] sm:$0xf]
        %1571 = vset.pattern.permute.xlu0 12
        %1572 = vperm.xlu0 %1571, %v1567
        %v1573 = vpop.permute.xlu0 %1572
        %v1577 = vcombine.high %v1568, %v1568
        %1578 = vrot.lane.b32.xlu0 %v1568, 30
        %v1579 = vpop.permute.xlu0 %1578
        %1580 = vrot.lane.b32.xlu0 %v1577, 30
        %v1581 = vpop.permute.xlu0 %1580
        %1582 = vrot.lane.b32.xlu0 %v1569, 30
        %v1583 = vpop.permute.xlu0 %1582
        %vm1584 = vcmask 244736
        %v1585 = vsel %vm1584, %v1579, %v1581
        %v1586 = vsel %vm1584, %v1581, %v1583
        %v1589 = vmul.f32 %v1573, %v1585
        %v1590 = vmul.f32 %v1573, %v1586
        %v1591 = vadd.f32 %v1565, %v1589
        %v1592 = vadd.f32 %v1566, %v1590
        %v1593 = vld [vmem:[%s3] sm:$0xf]
        %v1594 = vld [vmem:[#allocation2] sm:$0xff]
        %v1595 = vld [vmem:[#allocation2 + $0x8] sm:$0xf]
        %1597 = vset.pattern.permute.xlu0 19
        %1598 = vperm.xlu0 %1597, %v1593
        %v1599 = vpop.permute.xlu0 %1598
        %v1603 = vcombine.high %v1594, %v1594
        %1604 = vrot.lane.b32.xlu0 %v1594, 14
        %v1605 = vpop.permute.xlu0 %1604
        %1606 = vrot.lane.b32.xlu0 %v1603, 14
        %v1607 = vpop.permute.xlu0 %1606
        %1608 = vrot.lane.b32.xlu0 %v1595, 14
        %v1609 = vpop.permute.xlu0 %1608
        %vm1610 = vcmask 113664
        %v1611 = vsel %vm1610, %v1605, %v1607
        %v1612 = vsel %vm1610, %v1607, %v1609
        %v1615 = vmul.f32 %v1599, %v1611
        %v1616 = vmul.f32 %v1599, %v1612
        %v1617 = vadd.f32 %v1591, %v1615
        %v1618 = vadd.f32 %v1592, %v1616
        %v1619 = vld [vmem:[%s3] sm:$0xf]
        %v1620 = vld [vmem:[#allocation2 + $0x4] sm:$0xff]
        %v1621 = vld [vmem:[#allocation2 + $0xc] sm:$0xf]
        %1623 = vset.pattern.permute.xlu0 26
        %1624 = vperm.xlu0 %1623, %v1619
        %v1625 = vpop.permute.xlu0 %1624
        %v1629 = vcombine.high %v1620, %v1620
        %1630 = vrot.lane.b32.xlu0 %v1620, 126
        %v1631 = vpop.permute.xlu0 %1630
        %1632 = vrot.lane.b32.xlu0 %v1629, 126
        %v1633 = vpop.permute.xlu0 %1632
        %1634 = vrot.lane.b32.xlu0 %v1621, 126
        %v1635 = vpop.permute.xlu0 %1634
        %vm1636 = vcmask 1031168
        %v1637 = vsel %vm1636, %v1631, %v1633
        %v1638 = vsel %vm1636, %v1633, %v1635
        %v1641 = vmul.f32 %v1625, %v1637
        %v1642 = vmul.f32 %v1625, %v1638
        %v1643 = vadd.f32 %v1617, %v1641
        %v1644 = vadd.f32 %v1618, %v1642
        %v1645 = vld [vmem:[%s3] sm:$0xf]
        %v1646 = vld [vmem:[#allocation2 + $0x4] sm:$0xff]
        %v1647 = vld [vmem:[#allocation2 + $0xc] sm:$0xf]
        %1649 = vset.pattern.permute.xlu0 33
        %1650 = vperm.xlu0 %1649, %v1645
        %v1651 = vpop.permute.xlu0 %1650
        %v1655 = vcombine.high %v1646, %v1646
        %1656 = vrot.lane.b32.xlu0 %v1646, 110
        %v1657 = vpop.permute.xlu0 %1656
        %1658 = vrot.lane.b32.xlu0 %v1655, 110
        %v1659 = vpop.permute.xlu0 %1658
        %1660 = vrot.lane.b32.xlu0 %v1647, 110
        %v1661 = vpop.permute.xlu0 %1660
        %vm1662 = vcmask 900096
        %v1663 = vsel %vm1662, %v1657, %v1659
        %v1664 = vsel %vm1662, %v1659, %v1661
        %v1667 = vmul.f32 %v1651, %v1663
        %v1668 = vmul.f32 %v1651, %v1664
        %v1669 = vadd.f32 %v1643, %v1667
        %v1670 = vadd.f32 %v1644, %v1668
        %v1671 = vld [vmem:[%s3] sm:$0xf]
        %v1672 = vld [vmem:[#allocation2 + $0x4] sm:$0xff]
        %v1673 = vld [vmem:[#allocation2 + $0xc] sm:$0xf]
        %1675 = vset.pattern.permute.xlu0 40
        %1676 = vperm.xlu0 %1675, %v1671
        %v1677 = vpop.permute.xlu0 %1676
        %v1681 = vcombine.high %v1672, %v1672
        %1682 = vrot.lane.b32.xlu0 %v1672, 94
        %v1683 = vpop.permute.xlu0 %1682
        %1684 = vrot.lane.b32.xlu0 %v1681, 94
        %v1685 = vpop.permute.xlu0 %1684
        %1686 = vrot.lane.b32.xlu0 %v1673, 94
        %v1687 = vpop.permute.xlu0 %1686
        %vm1688 = vcmask 769024
        %v1689 = vsel %vm1688, %v1683, %v1685
        %v1690 = vsel %vm1688, %v1685, %v1687
        %v1693 = vmul.f32 %v1677, %v1689
        %v1694 = vmul.f32 %v1677, %v1690
        %v1695 = vadd.f32 %v1669, %v1693
        %v1696 = vadd.f32 %v1670, %v1694
        %v1697 = vld [vmem:[%s3] sm:$0xf]
        %v1698 = vld [vmem:[#allocation2 + $0x4] sm:$0xff]
        %v1699 = vld [vmem:[#allocation2 + $0xc] sm:$0xf]
        %1701 = vset.pattern.permute.xlu0 47
        %1702 = vperm.xlu0 %1701, %v1697
        %v1703 = vpop.permute.xlu0 %1702
        %v1707 = vcombine.high %v1698, %v1698
        %1708 = vrot.lane.b32.xlu0 %v1698, 78
        %v1709 = vpop.permute.xlu0 %1708
        %1710 = vrot.lane.b32.xlu0 %v1707, 78
        %v1711 = vpop.permute.xlu0 %1710
        %1712 = vrot.lane.b32.xlu0 %v1699, 78
        %v1713 = vpop.permute.xlu0 %1712
        %vm1714 = vcmask 637952
        %v1715 = vsel %vm1714, %v1709, %v1711
        %v1716 = vsel %vm1714, %v1711, %v1713
        %v1719 = vmul.f32 %v1703, %v1715
        %v1720 = vmul.f32 %v1703, %v1716
        %v1721 = vadd.f32 %v1695, %v1719
        %v1722 = vadd.f32 %v1696, %v1720
        %vm1723 = vcmp.ge.s32.totalorder %v585, 4294967294
        %vm1724 = vcmp.ge.s32.totalorder %v586, 4294967294
        %vm1725 = vcmp.lt.s32.totalorder %v585, 14
        %vm1726 = vcmp.lt.s32.totalorder %v586, 14
        %vm1727 = vmand %vm1723, %vm1725
        %vm1728 = vmand %vm1724, %vm1726
        %v1729 = vsel %vm1727, 1, 0
        %v1730 = vsel %vm1728, 1, 0
        %vm1731 = vcmp.eq.s32.totalorder %v1729, 1
        %vm1732 = vcmp.eq.s32.totalorder %v1730, 1
        %v1733 = vsel %vm1731, %v1721, 0.0
        %v1734 = vsel %vm1732, %v1722, 0.0
        %v1735 = vadd.f32 %v1539, %v1733
        %v1736 = vadd.f32 %v1540, %v1734
        %v1737 = vld [vmem:[%s3] sm:$0xf]
        %v1738 = vld [vmem:[#allocation2] sm:$0xff]
        %v1739 = vld [vmem:[#allocation2 + $0x8] sm:$0xf]
        %1741 = vset.pattern.permute.xlu0 6
        %1742 = vperm.xlu0 %1741, %v1737
        %v1743 = vpop.permute.xlu0 %1742
        %v1747 = vcombine.high %v1738, %v1738
        %1748 = vrot.lane.b32.xlu0 %v1738, 45
        %v1749 = vpop.permute.xlu0 %1748
        %1750 = vrot.lane.b32.xlu0 %v1747, 45
        %v1751 = vpop.permute.xlu0 %1750
        %1752 = vrot.lane.b32.xlu0 %v1739, 45
        %v1753 = vpop.permute.xlu0 %1752
        %vm1754 = vcmask 367616
        %v1755 = vsel %vm1754, %v1749, %v1751
        %v1756 = vsel %vm1754, %v1751, %v1753
        %v1759 = vmul.f32 %v1743, %v1755
        %v1760 = vmul.f32 %v1743, %v1756
        %v1761 = vadd.f32 %v1759, 0.0
        %v1762 = vadd.f32 %v1760, 0.0
        %v1763 = vld [vmem:[%s3] sm:$0xf]
        %v1764 = vld [vmem:[#allocation2] sm:$0xff]
        %v1765 = vld [vmem:[#allocation2 + $0x8] sm:$0xf]
        %1767 = vset.pattern.permute.xlu0 13
        %1768 = vperm.xlu0 %1767, %v1763
        %v1769 = vpop.permute.xlu0 %1768
        %v1773 = vcombine.high %v1764, %v1764
        %1774 = vrot.lane.b32.xlu0 %v1764, 29
        %v1775 = vpop.permute.xlu0 %1774
        %1776 = vrot.lane.b32.xlu0 %v1773, 29
        %v1777 = vpop.permute.xlu0 %1776
        %1778 = vrot.lane.b32.xlu0 %v1765, 29
        %v1779 = vpop.permute.xlu0 %1778
        %vm1780 = vcmask 236544
        %v1781 = vsel %vm1780, %v1775, %v1777
        %v1782 = vsel %vm1780, %v1777, %v1779
        %v1785 = vmul.f32 %v1769, %v1781
        %v1786 = vmul.f32 %v1769, %v1782
        %v1787 = vadd.f32 %v1761, %v1785
        %v1788 = vadd.f32 %v1762, %v1786
        %v1789 = vld [vmem:[%s3] sm:$0xf]
        %v1790 = vld [vmem:[#allocation2] sm:$0xff]
        %v1791 = vld [vmem:[#allocation2 + $0x8] sm:$0xf]
        %1793 = vset.pattern.permute.xlu0 20
        %1794 = vperm.xlu0 %1793, %v1789
        %v1795 = vpop.permute.xlu0 %1794
        %v1799 = vcombine.high %v1790, %v1790
        %1800 = vrot.lane.b32.xlu0 %v1790, 13
        %v1801 = vpop.permute.xlu0 %1800
        %1802 = vrot.lane.b32.xlu0 %v1799, 13
        %v1803 = vpop.permute.xlu0 %1802
        %1804 = vrot.lane.b32.xlu0 %v1791, 13
        %v1805 = vpop.permute.xlu0 %1804
        %vm1806 = vcmask 105472
        %v1807 = vsel %vm1806, %v1801, %v1803
        %v1808 = vsel %vm1806, %v1803, %v1805
        %v1811 = vmul.f32 %v1795, %v1807
        %v1812 = vmul.f32 %v1795, %v1808
        %v1813 = vadd.f32 %v1787, %v1811
        %v1814 = vadd.f32 %v1788, %v1812
        %v1815 = vld [vmem:[%s3] sm:$0xf]
        %v1816 = vld [vmem:[#allocation2 + $0x4] sm:$0xff]
        %v1817 = vld [vmem:[#allocation2 + $0xc] sm:$0xf]
        %1819 = vset.pattern.permute.xlu0 27
        %1820 = vperm.xlu0 %1819, %v1815
        %v1821 = vpop.permute.xlu0 %1820
        %v1825 = vcombine.high %v1816, %v1816
        %1826 = vrot.lane.b32.xlu0 %v1816, 125
        %v1827 = vpop.permute.xlu0 %1826
        %1828 = vrot.lane.b32.xlu0 %v1825, 125
        %v1829 = vpop.permute.xlu0 %1828
        %1830 = vrot.lane.b32.xlu0 %v1817, 125
        %v1831 = vpop.permute.xlu0 %1830
        %vm1832 = vcmask 1022976
        %v1833 = vsel %vm1832, %v1827, %v1829
        %v1834 = vsel %vm1832, %v1829, %v1831
        %v1837 = vmul.f32 %v1821, %v1833
        %v1838 = vmul.f32 %v1821, %v1834
        %v1839 = vadd.f32 %v1813, %v1837
        %v1840 = vadd.f32 %v1814, %v1838
        %v1841 = vld [vmem:[%s3] sm:$0xf]
        %v1842 = vld [vmem:[#allocation2 + $0x4] sm:$0xff]
        %v1843 = vld [vmem:[#allocation2 + $0xc] sm:$0xf]
        %1845 = vset.pattern.permute.xlu0 34
        %1846 = vperm.xlu0 %1845, %v1841
        %v1847 = vpop.permute.xlu0 %1846
        %v1851 = vcombine.high %v1842, %v1842
        %1852 = vrot.lane.b32.xlu0 %v1842, 109
        %v1853 = vpop.permute.xlu0 %1852
        %1854 = vrot.lane.b32.xlu0 %v1851, 109
        %v1855 = vpop.permute.xlu0 %1854
        %1856 = vrot.lane.b32.xlu0 %v1843, 109
        %v1857 = vpop.permute.xlu0 %1856
        %vm1858 = vcmask 891904
        %v1859 = vsel %vm1858, %v1853, %v1855
        %v1860 = vsel %vm1858, %v1855, %v1857
        %v1863 = vmul.f32 %v1847, %v1859
        %v1864 = vmul.f32 %v1847, %v1860
        %v1865 = vadd.f32 %v1839, %v1863
        %v1866 = vadd.f32 %v1840, %v1864
        %v1867 = vld [vmem:[%s3] sm:$0xf]
        %v1868 = vld [vmem:[#allocation2 + $0x4] sm:$0xff]
        %v1869 = vld [vmem:[#allocation2 + $0xc] sm:$0xf]
        %1871 = vset.pattern.permute.xlu0 41
        %1872 = vperm.xlu0 %1871, %v1867
        %v1873 = vpop.permute.xlu0 %1872
        %v1877 = vcombine.high %v1868, %v1868
        %1878 = vrot.lane.b32.xlu0 %v1868, 93
        %v1879 = vpop.permute.xlu0 %1878
        %1880 = vrot.lane.b32.xlu0 %v1877, 93
        %v1881 = vpop.permute.xlu0 %1880
        %1882 = vrot.lane.b32.xlu0 %v1869, 93
        %v1883 = vpop.permute.xlu0 %1882
        %vm1884 = vcmask 760832
        %v1885 = vsel %vm1884, %v1879, %v1881
        %v1886 = vsel %vm1884, %v1881, %v1883
        %v1889 = vmul.f32 %v1873, %v1885
        %v1890 = vmul.f32 %v1873, %v1886
        %v1891 = vadd.f32 %v1865, %v1889
        %v1892 = vadd.f32 %v1866, %v1890
        %v1893 = vld [vmem:[%s3] sm:$0xf]
        %v1894 = vld [vmem:[#allocation2 + $0x4] sm:$0xff]
        %v1895 = vld [vmem:[#allocation2 + $0xc] sm:$0xf]
        %1897 = vset.pattern.permute.xlu0 48
        %1898 = vperm.xlu0 %1897, %v1893
        %v1899 = vpop.permute.xlu0 %1898
        %v1903 = vcombine.high %v1894, %v1894
        %1904 = vrot.lane.b32.xlu0 %v1894, 77
        %v1905 = vpop.permute.xlu0 %1904
        %1906 = vrot.lane.b32.xlu0 %v1903, 77
        %v1907 = vpop.permute.xlu0 %1906
        %1908 = vrot.lane.b32.xlu0 %v1895, 77
        %v1909 = vpop.permute.xlu0 %1908
        %vm1910 = vcmask 629760
        %v1911 = vsel %vm1910, %v1905, %v1907
        %v1912 = vsel %vm1910, %v1907, %v1909
        %v1915 = vmul.f32 %v1899, %v1911
        %v1916 = vmul.f32 %v1899, %v1912
        %v1917 = vadd.f32 %v1891, %v1915
        %v1918 = vadd.f32 %v1892, %v1916
        %vm1919 = vcmp.ge.s32.totalorder %v585, 4294967293
        %vm1920 = vcmp.ge.s32.totalorder %v586, 4294967293
        %vm1921 = vcmp.lt.s32.totalorder %v585, 13
        %vm1922 = vcmp.lt.s32.totalorder %v586, 13
        %vm1923 = vmand %vm1919, %vm1921
        %vm1924 = vmand %vm1920, %vm1922
        %v1925 = vsel %vm1923, 1, 0
        %v1926 = vsel %vm1924, 1, 0
        %vm1927 = vcmp.eq.s32.totalorder %v1925, 1
        %vm1928 = vcmp.eq.s32.totalorder %v1926, 1
        %v1929 = vsel %vm1927, %v1917, 0.0
        %v1930 = vsel %vm1928, %v1918, 0.0
        %v1931 = vadd.f32 %v1735, %v1929
        %v1932 = vadd.f32 %v1736, %v1930
        %v1935 = vrot.slane %v1931, 2
        %v1936 = vrot.slane %v1932, 2
        %v1939 = vadd.f32 %v1931, %v1935
        %v1940 = vadd.f32 %v1932, %v1936
        %v1941 = vxor.u32 %v1939, 2147483648
        %v1942 = vxor.u32 %v1940, 2147483648
        %v1943 = vmul.f32 %v1941, 1.442695
        %v1944 = vpow.pop %v1943
        %v1945 = vmul.f32 %v1942, 1.442695
        %v1946 = vpow.pop %v1945
        %v1947 = vadd.f32 %v1944, 1.0
        %v1948 = vadd.f32 %v1946, 1.0
        %v1949 = vrcp.pop %v1947
        %v1950 = vmul.f32 1.0, %v1949
        %v1951 = vrcp.pop %v1948
        %v1952 = vmul.f32 1.0, %v1951
        %v1955 = vcombine.low %v1950, %v1952
        %v1957 = vunpack.c.l.s4 1983009808
        %v1958 = vunpack.c.0.s8 %v1957
        %v1959 = vlaneseq
        %v1960 = vshrl.u32 %v1959, 7
        %v1961 = vsub.s32 %v1958, %v1960
        %v1962 = vrot.slane %v1955, %v1961
        %1964 = vst [vmem:[#allocation3] sm:$0xf] %v1962
        loop: start=0, step=1, limit=2
        $region55: #{tpu_custom_call.1} parent=35 // loop_pre_header
          _
        $region56: #{tpu_custom_call.1} parent=35 // loop_header
          %s1966 = sphi 0, %s1970
          %p1967 = scmp.ge.s32.totalorder %s1966, 2
        $region57: #{tpu_custom_call.1} parent=35 // loop_header_branch
          %1969 = sbr.rel (%p1967) target = $region61
        $region58: #{tpu_custom_call.1} parent=35 // loop_body
          %s1971 = smul.u32 %s1966, 4
          %s1972 = smul.addr %s1971, 8
          %s1973 = scalar_lea.vmem %s192, %s1972 [#allocation4]
          %v1974 = vld [vmem:[%s1973] sm:$0xff]
          %v1975 = vld [vmem:[%s1973 + $0x8] sm:$0xff]
          %v1976 = vld [vmem:[%s1973 + $0x10] sm:$0xff]
          %v1977 = vld [vmem:[%s1973 + $0x18] sm:$0xff]
          %s1978 = sshra.s32 %s1966, 1
          %s1979 = sand.u32 %s1966, 1
          %s1980 = sshra.s32 %s1966, 1
          %s1981 = sand.u32 %s1966, 1
          %s1982 = smul.u32 %s1978, 2
          %s1983 = smul.u32 %s1982, 2
          %s1984 = sadd.s32 %s1983, %s1981
          %s1985 = scalar_lea.vmem [#allocation3], %s1984
          %v1986 = vld [vmem:[%s1985] ss:$2 sm:$0x3]
          %v1987 = vstv %s1966
          %vm1988 = vcmp.eq.s32.totalorder %v225, %v1987
          %v1989 = vsel %vm1988, %v440, 0.0
          %v1990 = vsel %vm1988, %v442, 0.0
          %v1991 = vsel %vm345, %v1989, 0.0
          %1992 = vadd.xlane.f32.xlu0 %v1991
          %v1993 = vpop.xlane.xlu0 %1992
          %v1994 = vsel %vm345, %v1990, 0.0
          %1995 = vadd.xlane.f32.xlu0 %v1994
          %v1996 = vpop.xlane.xlu0 %1995
          %v1997 = vmul.f32 %v1974, %v1993
          %v1998 = vmul.f32 %v1975, %v1993
          %v1999 = vmul.f32 %v1976, %v1996
          %v2000 = vmul.f32 %v1977, %v1996
          %v2002 = vlaneseq
          %v2003 = vshrl.u32 %v2002, 7
          %v2004 = vsub.s32 0, %v2003
          %v2005 = vrot.slane %v1986, %v2004
          %v2006 = vlaneseq
          %v2007 = vshrl.u32 %v2006, 7
          %v2008 = vsub.s32 1, %v2007
          %v2009 = vrot.slane %v1986, %v2008
          %v2012 = vmul.f32 %v1997, %v2005
          %v2013 = vmul.f32 %v1998, %v2009
          %v2014 = vmul.f32 %v1999, %v2005
          %v2015 = vmul.f32 %v2000, %v2009
          %s2016 = smul.addr %s1971, 8
          %s2017 = scalar_lea.vmem %s216, %s2016 [#allocation7]
          %2018 = vst [vmem:[%s2017] sm:$0xff] %v2012
          %2019 = vst [vmem:[%s2017 + $0x8] sm:$0xff] %v2013
          %2020 = vst [vmem:[%s2017 + $0x10] sm:$0xff] %v2014
          %2021 = vst [vmem:[%s2017 + $0x18] sm:$0xff] %v2015
        $region59: #{tpu_custom_call.1} parent=35 // loop_footer
          %s1970 = sadd.s32 1, %s1966
        $region60: #{tpu_custom_call.1} parent=35 // loop_footer_branch
          %1965 = sbr.rel target = $region56
        $region61: #{tpu_custom_call.1} parent=35 // loop_exit
          _
        %s2022 = sand.u32 %s118, 1
        %s2023 = scalar_lea.sflag [#allocation6], %s2022
        %s2024 = sand.u32 %s118, 1
        %s2025 = smul.addr %s2024, 64
        %s2026 = scalar_lea.vmem [#allocation7], %s2025
        // Predicated region
        $region62: #{tpu_custom_call.1} parent=35 // pred_check
          %p2027 = pneg %p128
        $region63: #{tpu_custom_call.1} parent=35 // pred_check_branch
          %2029 = sbr.rel (%p2027) target = $region65
        $region64: #{tpu_custom_call.1} parent=35 // pred_region
          %s2030 = smul.u32 2, %s21
          %s2032 = ssub.s32 1024, 1024
          %2033 = vsyncadd %s2023, %s2032
          %s2034 = smul.addr %s2030, 4
          %s2035 = smul.addr %s2034, 128
          %s2036 = scalar_lea.hbm %s4, %s2035
          %s2037 = sshll.u32 %s2026, 4
          %s2038 = int_to_ptr.vmem [resolvable:$true] %s2037
          %2043 = dma.vmem_to_hbm [thread:$0]  %s2038, 1024, %s2036, %s2023, 256, 256, 16
        $region65: #{tpu_custom_call.1} parent=35 // pred_fallthru
          _
      $region36: #{tpu_custom_call.1} parent=5 // pred_fallthru
        _
      %p2044 = scmp.le.s32.totalorder 2, %s16
      // Predicated region
      $region66: #{tpu_custom_call.1} parent=5 // pred_check
        %p2045 = pneg %p2044
      $region67: #{tpu_custom_call.1} parent=5 // pred_check_branch
        %2047 = sbr.rel (%p2045) target = $region69
      $region68: #{tpu_custom_call.1} parent=5 // pred_region
        %s2048 = ssub.s32 %s16, 2
        // Predicated region
        $region70: #{tpu_custom_call.1} parent=68 // pred_check
          %p2049 = pneg %p134
        $region71: #{tpu_custom_call.1} parent=68 // pred_check_branch
          %2051 = sbr.rel (%p2049) target = $region73
        $region72: #{tpu_custom_call.1} parent=68 // pred_region
          %s2052 = sand.u32 %s119, 1
          %s2053 = scalar_lea.sflag [#allocation6], %s2052
          %s2054 = sand.u32 %s119, 1
          %s2055 = smul.addr %s2054, 64
          %s2056 = scalar_lea.vmem [#allocation7], %s2055
          %2057 = dma.done %s2053, 1024
        $region73: #{tpu_custom_call.1} parent=68 // pred_fallthru
          _
      $region69: #{tpu_custom_call.1} parent=5 // pred_fallthru
        _
    $region6: #{tpu_custom_call.1} parent=1 // loop_footer
      %s20 = sadd.s32 1, %s16
    $region7: #{tpu_custom_call.1} parent=1 // loop_footer_branch
      %15 = sbr.rel target = $region3
    $region8: #{tpu_custom_call.1} parent=1 // loop_exit
      _
    %2058 = vsyncpa [#allocation5], 1
    %s2059 = scalar_lea.sflag [#allocation5], 1
    %2060 = vsyncpa %s2059, 1
    %2061 = vsyncpa [#allocation6], 1
    %s2062 = scalar_lea.sflag [#allocation6], 1
    %2063 = vsyncpa %s2062, 1

</llo_original>
